<compile_context>
chip_gen: v7x
topology: tpu7x:2x2x1
jax: 0.10.0
libtpu: 0.0.40
codegen_flags: <defaults>
</compile_context>

<pallas_src>
import functools

import jax
import jax.numpy as jnp
from jax import lax
from jax.experimental import pallas as pl
from jax.experimental.pallas import tpu as pltpu

HIDDEN = 64
INPUT_SIZE = 1


def rnn_fc_kernel(x_ref, wih_ref, whh_ref, b_ref, fcw_ref, fcb_ref,
                  out_ref, h_ref, *, unroll):
    """One (batch-block, time-block) grid step.  Batch on lanes, hidden on sublanes.

    x_ref   : (tt, bb) f32   time-major input block (input_size==1 folded away)
    wih_ref : (H, 1)   f32   W_ih
    whh_ref : (H, H)   f32   W_hh
    b_ref   : (H, 1)   f32   b_ih + b_hh
    fcw_ref : (1, H)   f32   fc.weight
    fcb_ref : (1, 1)   f32   fc.bias
    out_ref : (1, bb)  f32   lane-dense output row for this batch block
    h_ref   : (H, bb)  f32   VMEM scratch: hidden state carried across T-blocks
    """
    t_blk = pl.program_id(1)

    @pl.when(t_blk == 0)
    def _():
        h_ref[...] = jnp.zeros_like(h_ref)

    tt = x_ref.shape[0]

    # Weights/bias loaded once per grid step; stay resident in vregs for the loop.
    wih = wih_ref[...]          # (H, 1)
    whh = whh_ref[...]          # (H, H)
    b = b_ref[...]              # (H, 1)

    def step(t, hc):
        # x_row / the input projection do not depend on hc, so they sit off the
        # serial h -> dot -> tanh -> h chain (free VPU filler under MXU latency).
        x_row = x_ref[pl.ds(t, 1), :]                        # (1, bb)
        pre = (wih * x_row + b
               + jnp.dot(whh, hc, preferred_element_type=jnp.float32))
        return jnp.tanh(pre)

    hc = lax.fori_loop(0, tt, step, h_ref[...], unroll=unroll)
    h_ref[...] = hc

    @pl.when(t_blk == pl.num_programs(1) - 1)
    def _():
        # y^T = fc.weight @ h_T + fc.bias   ->  lane-dense (1, bb) row.
        out_ref[...] = (jnp.dot(fcw_ref[...], h_ref[...],
                                preferred_element_type=jnp.float32)
                        + fcb_ref[...])


def _pick_block(total, candidates):
    """Largest candidate that strictly divides `total` (>=2 blocks), else full dim."""
    for c in candidates:
        if c < total and total % c == 0:
            return c
    return total


def net_forward(x, params, *, batch_block=None, time_block=None, max_unroll=8):
    """x: (B, T, 1) float32 (batch_first, like the PyTorch module)."""
    B, T, C = x.shape
    assert C == INPUT_SIZE

    # Lane-dense, time-major input: drop the trailing size-1 feature dim here.
    x_tm = jnp.transpose(x[..., 0], (1, 0))                 # (T, B)

    w_ih, w_hh, b_ih, b_hh, fc_w, fc_b = params
    bias = (b_ih + b_hh).reshape(HIDDEN, 1)                 # (H, 1)
    fcb = fc_b.reshape(1, 1)                                # (1, 1)

    # Block sizes must satisfy the (8, 128) rule when smaller than the full dim.
    bb = batch_block if batch_block is not None else _pick_block(B, (256, 128))
    tt = time_block if time_block is not None else _pick_block(
        T, (128, 64, 32, 16, 8))
    assert B % bb == 0 and (bb == B or bb % 128 == 0)
    assert T % tt == 0 and (tt == T or tt % 8 == 0)

    grid = (B // bb, T // tt)                                # (parallel, arbitrary)
    unroll = max(1, min(max_unroll, tt))
    kernel = functools.partial(rnn_fc_kernel, unroll=unroll)

    # Explicit VMEM budget (bytes): double-buffered x blocks + h + weights + out.
    pad = lambda n, m: -(-n // m) * m
    est = 4 * (2 * pad(tt, 8) * pad(bb, 128)                 # x (double-buffered)
               + pad(HIDDEN, 8) * pad(bb, 128)               # h scratch
               + 2 * 8 * pad(bb, 128)                        # out row (dbl-buffered)
               + pad(HIDDEN, 8) * pad(HIDDEN, 128)           # W_hh
               + 4 * pad(HIDDEN, 8) * 128)                   # small weight tiles
    vmem_limit = int(min(max(2 * est, 32 * 2**20), 64 * 2**20))

    rep = lambda bi, ti: (0, 0)                              # replicated weights
    out = pl.pallas_call(
        kernel,
        out_shape=jax.ShapeDtypeStruct((1, B), jnp.float32),
        grid_spec=pltpu.PrefetchScalarGridSpec(
            num_scalar_prefetch=0,
            grid=grid,
            in_specs=[
                pl.BlockSpec((tt, bb), lambda bi, ti: (ti, bi)),   # x (time-major)
                pl.BlockSpec((HIDDEN, 1), rep),                    # W_ih
                pl.BlockSpec((HIDDEN, HIDDEN), rep),               # W_hh
                pl.BlockSpec((HIDDEN, 1), rep),                    # b_ih + b_hh
                pl.BlockSpec((1, HIDDEN), rep),                    # fc.weight
                pl.BlockSpec((1, 1), rep),                         # fc.bias
            ],
            out_specs=pl.BlockSpec((1, bb), lambda bi, ti: (0, bi)),
            scratch_shapes=[pltpu.VMEM((HIDDEN, bb), jnp.float32)],
        ),
        compiler_params=pltpu.CompilerParams(
            dimension_semantics=("parallel", "arbitrary"),
            vmem_limit_bytes=vmem_limit),
    )(x_tm, w_ih, w_hh, bias, fc_w, fcb)

    return out.reshape(B, 1)


def init_params(key):
    """Deterministic synthetic params with the same shapes as the PyTorch module."""
    ks = jax.random.split(key, 6)
    k = 1.0 / jnp.sqrt(HIDDEN)
    w_ih = jax.random.uniform(ks[0], (HIDDEN, INPUT_SIZE), jnp.float32, -k, k)
    w_hh = jax.random.uniform(ks[1], (HIDDEN, HIDDEN), jnp.float32, -k, k)
    b_ih = jax.random.uniform(ks[2], (HIDDEN,), jnp.float32, -k, k)
    b_hh = jax.random.uniform(ks[3], (HIDDEN,), jnp.float32, -k, k)
    fc_w = jax.random.uniform(ks[4], (1, HIDDEN), jnp.float32, -k, k)
    fc_b = jax.random.uniform(ks[5], (1,), jnp.float32, -k, k)
    return (w_ih, w_hh, b_ih, b_hh, fc_w, fc_b)


def reference_forward(x, params):
    """Pure-JAX reference of the PyTorch forward pass (for sanity check)."""
    w_ih, w_hh, b_ih, b_hh, fc_w, fc_b = params
    B, T, _ = x.shape
    h = jnp.zeros((B, HIDDEN), jnp.float32)
    for t in range(T):
        h = jnp.tanh(x[:, t, :] @ w_ih.T + h @ w_hh.T + b_ih + b_hh)
    return h @ fc_w.T + fc_b


if __name__ == "__main__":
    key = jax.random.PRNGKey(0)
    k_x, k_p = jax.random.split(key)

    B, T = 2, 8                                      # small shapes: batch=2, seq=8
    x = jax.random.normal(k_x, (B, T, INPUT_SIZE), jnp.float32)
    params = init_params(k_p)

    y = net_forward(x, params)
    jax.block_until_ready(y)

    y_ref = reference_forward(x, params)
    assert y.shape == (B, 1)
    assert jnp.allclose(y, y_ref, atol=1e-5, rtol=1e-5)

    print("KERNEL_OK")
</pallas_src>

<mosaic_0001>
module attributes {stable_mosaic.version = 11 : i64} {
  func.func @rnn_fc_kernel(%arg0: i32, %arg1: i32, %arg2: memref<8x2xf32, #tpu.memory_space<vmem>>, %arg3: memref<64x1xf32, #tpu.memory_space<vmem>>, %arg4: memref<64x64xf32, #tpu.memory_space<vmem>>, %arg5: memref<64x1xf32, #tpu.memory_space<vmem>>, %arg6: memref<1x64xf32, #tpu.memory_space<vmem>>, %arg7: memref<1x1xf32, #tpu.memory_space<vmem>>, %arg8: memref<1x2xf32, #tpu.memory_space<vmem>>, %arg9: memref<64x2xf32, #tpu.memory_space<vmem>>) attributes {dimension_semantics = [#tpu.dimension_semantics<parallel>, #tpu.dimension_semantics<arbitrary>], iteration_bounds = array<i64: 1, 1>, scalar_prefetch = 0 : i64, scratch_operands = 1 : i64, tpu.core_type = #tpu.core_type<tc>, window_params = [{transform_indices = @transform_0, window_bounds = array<i64: 8, 2>}, {pipeline_mode = #tpu.pipeline_mode<synchronous>, transform_indices = @transform_1, window_bounds = array<i64: 64, 1>}, {pipeline_mode = #tpu.pipeline_mode<synchronous>, transform_indices = @transform_2, window_bounds = array<i64: 64, 64>}, {pipeline_mode = #tpu.pipeline_mode<synchronous>, transform_indices = @transform_3, window_bounds = array<i64: 64, 1>}, {pipeline_mode = #tpu.pipeline_mode<synchronous>, transform_indices = @transform_4, window_bounds = array<i64: 1, 64>}, {pipeline_mode = #tpu.pipeline_mode<synchronous>, transform_indices = @transform_5, window_bounds = array<i64: 1, 1>}, {transform_indices = @transform_6, window_bounds = array<i64: 1, 2>}]} {
    %c0_i32 = arith.constant 0 : i32
    %0 = arith.cmpi eq, %arg1, %c0_i32 : i32
    %1 = arith.extui %0 : i1 to i32
    %c0_i32_0 = arith.constant 0 : i32
    %2 = arith.cmpi ne, %1, %c0_i32_0 : i32
    scf.if %2 {
      %cst_28 = arith.constant 0.000000e+00 : f32
      %91 = vector.broadcast %cst_28 : f32 to vector<64x2xf32>
      %c0_29 = arith.constant 0 : index
      %c0_30 = arith.constant 0 : index
      %92 = vector.load %arg9[%c0_29, %c0_30] : memref<64x2xf32, #tpu.memory_space<vmem>>, vector<64x2xf32>
      tpu.vector_store %arg9[%c0_29, %c0_30], %91 {strides = array<i32>} : memref<64x2xf32, #tpu.memory_space<vmem>>, vector<64x2xf32>,
    } else {
    }
    %c0 = arith.constant 0 : index
    %c0_1 = arith.constant 0 : index
    %3 = vector.load %arg3[%c0, %c0_1] : memref<64x1xf32, #tpu.memory_space<vmem>>, vector<64x1xf32>
    %c0_2 = arith.constant 0 : index
    %c0_3 = arith.constant 0 : index
    %4 = vector.load %arg4[%c0_2, %c0_3] : memref<64x64xf32, #tpu.memory_space<vmem>>, vector<64x64xf32>
    %c0_4 = arith.constant 0 : index
    %c0_5 = arith.constant 0 : index
    %5 = vector.load %arg5[%c0_4, %c0_5] : memref<64x1xf32, #tpu.memory_space<vmem>>, vector<64x1xf32>
    %c0_6 = arith.constant 0 : index
    %c0_7 = arith.constant 0 : index
    %6 = vector.load %arg9[%c0_6, %c0_7] : memref<64x2xf32, #tpu.memory_space<vmem>>, vector<64x2xf32>
    %c0_i32_8 = arith.constant 0 : i32
    %7 = arith.index_cast %c0_i32_8 : i32 to index
    %c0_9 = arith.constant 0 : index
    %8 = vector.load %arg2[%7, %c0_9] : memref<8x2xf32, #tpu.memory_space<vmem>>, vector<1x2xf32>
    %9 = vector.broadcast %3 : vector<64x1xf32> to vector<64x2xf32>
    %10 = vector.broadcast %8 : vector<1x2xf32> to vector<64x2xf32>
    %11 = arith.mulf %9, %10 : vector<64x2xf32>
    %12 = vector.broadcast %5 : vector<64x1xf32> to vector<64x2xf32>
    %13 = arith.addf %11, %12 : vector<64x2xf32>
    %cst = arith.constant dense<0.000000e+00> : vector<64x2xf32>
    %14 = tpu.matmul %4, %6, %cst {dimension_numbers = #tpu.dot_dimension_numbers<[1], [0], [0], [1], [0, 0, 1, 1], [], []>} : vector<64x64xf32>, vector<64x2xf32>, vector<64x2xf32> -> vector<64x2xf32>
    %15 = arith.addf %13, %14 : vector<64x2xf32>
    %16 = math.tanh %15 : vector<64x2xf32>
    %c1_i32 = arith.constant 1 : i32
    %17 = arith.index_cast %c1_i32 : i32 to index
    %c0_10 = arith.constant 0 : index
    %18 = vector.load %arg2[%17, %c0_10] : memref<8x2xf32, #tpu.memory_space<vmem>>, vector<1x2xf32>
    %19 = vector.broadcast %3 : vector<64x1xf32> to vector<64x2xf32>
    %20 = vector.broadcast %18 : vector<1x2xf32> to vector<64x2xf32>
    %21 = arith.mulf %19, %20 : vector<64x2xf32>
    %22 = vector.broadcast %5 : vector<64x1xf32> to vector<64x2xf32>
    %23 = arith.addf %21, %22 : vector<64x2xf32>
    %cst_11 = arith.constant dense<0.000000e+00> : vector<64x2xf32>
    %24 = tpu.matmul %4, %16, %cst_11 {dimension_numbers = #tpu.dot_dimension_numbers<[1], [0], [0], [1], [0, 0, 1, 1], [], []>} : vector<64x64xf32>, vector<64x2xf32>, vector<64x2xf32> -> vector<64x2xf32>
    %25 = arith.addf %23, %24 : vector<64x2xf32>
    %26 = math.tanh %25 : vector<64x2xf32>
    %c2_i32 = arith.constant 2 : i32
    %27 = arith.index_cast %c2_i32 : i32 to index
    %c0_12 = arith.constant 0 : index
    %28 = vector.load %arg2[%27, %c0_12] : memref<8x2xf32, #tpu.memory_space<vmem>>, vector<1x2xf32>
    %29 = vector.broadcast %3 : vector<64x1xf32> to vector<64x2xf32>
    %30 = vector.broadcast %28 : vector<1x2xf32> to vector<64x2xf32>
    %31 = arith.mulf %29, %30 : vector<64x2xf32>
    %32 = vector.broadcast %5 : vector<64x1xf32> to vector<64x2xf32>
    %33 = arith.addf %31, %32 : vector<64x2xf32>
    %cst_13 = arith.constant dense<0.000000e+00> : vector<64x2xf32>
    %34 = tpu.matmul %4, %26, %cst_13 {dimension_numbers = #tpu.dot_dimension_numbers<[1], [0], [0], [1], [0, 0, 1, 1], [], []>} : vector<64x64xf32>, vector<64x2xf32>, vector<64x2xf32> -> vector<64x2xf32>
    %35 = arith.addf %33, %34 : vector<64x2xf32>
    %36 = math.tanh %35 : vector<64x2xf32>
    %c3_i32 = arith.constant 3 : i32
    %37 = arith.index_cast %c3_i32 : i32 to index
    %c0_14 = arith.constant 0 : index
    %38 = vector.load %arg2[%37, %c0_14] : memref<8x2xf32, #tpu.memory_space<vmem>>, vector<1x2xf32>
    %39 = vector.broadcast %3 : vector<64x1xf32> to vector<64x2xf32>
    %40 = vector.broadcast %38 : vector<1x2xf32> to vector<64x2xf32>
    %41 = arith.mulf %39, %40 : vector<64x2xf32>
    %42 = vector.broadcast %5 : vector<64x1xf32> to vector<64x2xf32>
    %43 = arith.addf %41, %42 : vector<64x2xf32>
    %cst_15 = arith.constant dense<0.000000e+00> : vector<64x2xf32>
    %44 = tpu.matmul %4, %36, %cst_15 {dimension_numbers = #tpu.dot_dimension_numbers<[1], [0], [0], [1], [0, 0, 1, 1], [], []>} : vector<64x64xf32>, vector<64x2xf32>, vector<64x2xf32> -> vector<64x2xf32>
    %45 = arith.addf %43, %44 : vector<64x2xf32>
    %46 = math.tanh %45 : vector<64x2xf32>
    %c4_i32 = arith.constant 4 : i32
    %47 = arith.index_cast %c4_i32 : i32 to index
    %c0_16 = arith.constant 0 : index
    %48 = vector.load %arg2[%47, %c0_16] : memref<8x2xf32, #tpu.memory_space<vmem>>, vector<1x2xf32>
    %49 = vector.broadcast %3 : vector<64x1xf32> to vector<64x2xf32>
    %50 = vector.broadcast %48 : vector<1x2xf32> to vector<64x2xf32>
    %51 = arith.mulf %49, %50 : vector<64x2xf32>
    %52 = vector.broadcast %5 : vector<64x1xf32> to vector<64x2xf32>
    %53 = arith.addf %51, %52 : vector<64x2xf32>
    %cst_17 = arith.constant dense<0.000000e+00> : vector<64x2xf32>
    %54 = tpu.matmul %4, %46, %cst_17 {dimension_numbers = #tpu.dot_dimension_numbers<[1], [0], [0], [1], [0, 0, 1, 1], [], []>} : vector<64x64xf32>, vector<64x2xf32>, vector<64x2xf32> -> vector<64x2xf32>
    %55 = arith.addf %53, %54 : vector<64x2xf32>
    %56 = math.tanh %55 : vector<64x2xf32>
    %c5_i32 = arith.constant 5 : i32
    %57 = arith.index_cast %c5_i32 : i32 to index
    %c0_18 = arith.constant 0 : index
    %58 = vector.load %arg2[%57, %c0_18] : memref<8x2xf32, #tpu.memory_space<vmem>>, vector<1x2xf32>
    %59 = vector.broadcast %3 : vector<64x1xf32> to vector<64x2xf32>
    %60 = vector.broadcast %58 : vector<1x2xf32> to vector<64x2xf32>
    %61 = arith.mulf %59, %60 : vector<64x2xf32>
    %62 = vector.broadcast %5 : vector<64x1xf32> to vector<64x2xf32>
    %63 = arith.addf %61, %62 : vector<64x2xf32>
    %cst_19 = arith.constant dense<0.000000e+00> : vector<64x2xf32>
    %64 = tpu.matmul %4, %56, %cst_19 {dimension_numbers = #tpu.dot_dimension_numbers<[1], [0], [0], [1], [0, 0, 1, 1], [], []>} : vector<64x64xf32>, vector<64x2xf32>, vector<64x2xf32> -> vector<64x2xf32>
    %65 = arith.addf %63, %64 : vector<64x2xf32>
    %66 = math.tanh %65 : vector<64x2xf32>
    %c6_i32 = arith.constant 6 : i32
    %67 = arith.index_cast %c6_i32 : i32 to index
    %c0_20 = arith.constant 0 : index
    %68 = vector.load %arg2[%67, %c0_20] : memref<8x2xf32, #tpu.memory_space<vmem>>, vector<1x2xf32>
    %69 = vector.broadcast %3 : vector<64x1xf32> to vector<64x2xf32>
    %70 = vector.broadcast %68 : vector<1x2xf32> to vector<64x2xf32>
    %71 = arith.mulf %69, %70 : vector<64x2xf32>
    %72 = vector.broadcast %5 : vector<64x1xf32> to vector<64x2xf32>
    %73 = arith.addf %71, %72 : vector<64x2xf32>
    %cst_21 = arith.constant dense<0.000000e+00> : vector<64x2xf32>
    %74 = tpu.matmul %4, %66, %cst_21 {dimension_numbers = #tpu.dot_dimension_numbers<[1], [0], [0], [1], [0, 0, 1, 1], [], []>} : vector<64x64xf32>, vector<64x2xf32>, vector<64x2xf32> -> vector<64x2xf32>
    %75 = arith.addf %73, %74 : vector<64x2xf32>
    %76 = math.tanh %75 : vector<64x2xf32>
    %c7_i32 = arith.constant 7 : i32
    %77 = arith.index_cast %c7_i32 : i32 to index
    %c0_22 = arith.constant 0 : index
    %78 = vector.load %arg2[%77, %c0_22] : memref<8x2xf32, #tpu.memory_space<vmem>>, vector<1x2xf32>
    %79 = vector.broadcast %3 : vector<64x1xf32> to vector<64x2xf32>
    %80 = vector.broadcast %78 : vector<1x2xf32> to vector<64x2xf32>
    %81 = arith.mulf %79, %80 : vector<64x2xf32>
    %82 = vector.broadcast %5 : vector<64x1xf32> to vector<64x2xf32>
    %83 = arith.addf %81, %82 : vector<64x2xf32>
    %cst_23 = arith.constant dense<0.000000e+00> : vector<64x2xf32>
    %84 = tpu.matmul %4, %76, %cst_23 {dimension_numbers = #tpu.dot_dimension_numbers<[1], [0], [0], [1], [0, 0, 1, 1], [], []>} : vector<64x64xf32>, vector<64x2xf32>, vector<64x2xf32> -> vector<64x2xf32>
    %85 = arith.addf %83, %84 : vector<64x2xf32>
    %86 = math.tanh %85 : vector<64x2xf32>
    %c8_i32 = arith.constant 8 : i32
    %c0_24 = arith.constant 0 : index
    %c0_25 = arith.constant 0 : index
    %87 = vector.load %arg9[%c0_24, %c0_25] : memref<64x2xf32, #tpu.memory_space<vmem>>, vector<64x2xf32>
    tpu.vector_store %arg9[%c0_24, %c0_25], %86 {strides = array<i32>} : memref<64x2xf32, #tpu.memory_space<vmem>>, vector<64x2xf32>,
    %c0_i32_26 = arith.constant 0 : i32
    %88 = arith.cmpi eq, %arg1, %c0_i32_26 : i32
    %89 = arith.extui %88 : i1 to i32
    %c0_i32_27 = arith.constant 0 : i32
    %90 = arith.cmpi ne, %89, %c0_i32_27 : i32
    scf.if %90 {
      %c0_28 = arith.constant 0 : index
      %c0_29 = arith.constant 0 : index
      %91 = vector.load %arg6[%c0_28, %c0_29] : memref<1x64xf32, #tpu.memory_space<vmem>>, vector<1x64xf32>
      %c0_30 = arith.constant 0 : index
      %c0_31 = arith.constant 0 : index
      %92 = vector.load %arg9[%c0_30, %c0_31] : memref<64x2xf32, #tpu.memory_space<vmem>>, vector<64x2xf32>
      %cst_32 = arith.constant dense<0.000000e+00> : vector<1x2xf32>
      %93 = tpu.matmul %91, %92, %cst_32 {dimension_numbers = #tpu.dot_dimension_numbers<[1], [0], [0], [1], [0, 0, 1, 1], [], []>} : vector<1x64xf32>, vector<64x2xf32>, vector<1x2xf32> -> vector<1x2xf32>
      %c0_33 = arith.constant 0 : index
      %c0_34 = arith.constant 0 : index
      %94 = vector.load %arg7[%c0_33, %c0_34] : memref<1x1xf32, #tpu.memory_space<vmem>>, vector<1x1xf32>
      %95 = vector.broadcast %94 : vector<1x1xf32> to vector<1x2xf32>
      %96 = arith.addf %93, %95 : vector<1x2xf32>
      %c0_35 = arith.constant 0 : index
      %c0_36 = arith.constant 0 : index
      %97 = vector.load %arg8[%c0_35, %c0_36] : memref<1x2xf32, #tpu.memory_space<vmem>>, vector<1x2xf32>
      tpu.vector_store %arg8[%c0_35, %c0_36], %96 {strides = array<i32>} : memref<1x2xf32, #tpu.memory_space<vmem>>, vector<1x2xf32>,
    } else {
    }
    return
  }
  func.func @transform_0(%arg0: i32, %arg1: i32) -> (i32, i32) {
    %c0_i32 = arith.constant 0 : i32
    return %arg1, %arg0 : i32, i32
  }
  func.func @transform_1(%arg0: i32, %arg1: i32) -> (i32, i32) {
    %c0_i32 = arith.constant 0 : i32
    %c0_i32_0 = arith.constant 0 : i32
    %c0_i32_1 = arith.constant 0 : i32
    return %c0_i32, %c0_i32_0 : i32, i32
  }
  func.func @transform_2(%arg0: i32, %arg1: i32) -> (i32, i32) {
    %c0_i32 = arith.constant 0 : i32
    %c0_i32_0 = arith.constant 0 : i32
    %c0_i32_1 = arith.constant 0 : i32
    return %c0_i32, %c0_i32_0 : i32, i32
  }
  func.func @transform_3(%arg0: i32, %arg1: i32) -> (i32, i32) {
    %c0_i32 = arith.constant 0 : i32
    %c0_i32_0 = arith.constant 0 : i32
    %c0_i32_1 = arith.constant 0 : i32
    return %c0_i32, %c0_i32_0 : i32, i32
  }
  func.func @transform_4(%arg0: i32, %arg1: i32) -> (i32, i32) {
    %c0_i32 = arith.constant 0 : i32
    %c0_i32_0 = arith.constant 0 : i32
    %c0_i32_1 = arith.constant 0 : i32
    return %c0_i32, %c0_i32_0 : i32, i32
  }
  func.func @transform_5(%arg0: i32, %arg1: i32) -> (i32, i32) {
    %c0_i32 = arith.constant 0 : i32
    %c0_i32_0 = arith.constant 0 : i32
    %c0_i32_1 = arith.constant 0 : i32
    return %c0_i32, %c0_i32_0 : i32, i32
  }
  func.func @transform_6(%arg0: i32, %arg1: i32) -> (i32, i32) {
    %c0_i32 = arith.constant 0 : i32
    %c0_i32_0 = arith.constant 0 : i32
    return %c0_i32, %arg0 : i32, i32
  }
}

</mosaic_0001>

<llo_original>
// kernel: tpu_custom_call.1
$region0: #{tpu_custom_call.1}
  #allocation0 [shape = 'u32[]', space=smem, size = 0x4, offset = 0x4, fixed_abs, tag = 'smem constant byte address 0x4 - core index']
  #allocation1 [shape = 'u32[144,128]{1,0:T(1,128)}', space=vmem, size = 0x12000, scoped, tag = 'internal scratch']
  #allocation2 [shape = 'f32[64,2]{1,0:T(8,128)}', space=vmem, size = 0x8000, scoped, tag = 'scratch operand']
  #allocation3 [shape = 'f32[1,1]{1,0:T(1,128)S(1)}', space=vmem, size = 0x200, scoped, tag = 'scoped memory for tpu_custom_call.1']
  %s0 = inlined_call_operand.vmem [shape: f32[8,2], index: 0, kind: input, shape index: {}]
  %s1 = inlined_call_operand.vmem [shape: f32[64,1], index: 1, kind: input, shape index: {}]
  %s2 = inlined_call_operand.vmem [shape: f32[64,64], index: 2, kind: input, shape index: {}]
  %s3 = inlined_call_operand.vmem [shape: f32[64,1], index: 3, kind: input, shape index: {}]
  %s4 = inlined_call_operand.vmem [shape: f32[1,64], index: 4, kind: input, shape index: {}]
  %s5 = inlined_call_operand.<no memory space> [shape: f32[1,1], index: 5, kind: input, shape index: {}]
  %s6 = inlined_call_operand.hbm [shape: f32[1,2], index: 6, kind: output, shape index: {}]
  %s7 = sld [smem:[#allocation0]]
  $region42: #{tpu_custom_call.1} parent=0
    _
  %s9 = ssub.s32 1, %s7
  %s10 = scalar_select 0, %s9, %s7
  %v11 = vstv %s5
  %12 = vst [vmem:[#allocation3] sm:$0x1] %v11
  $region1: #{tpu_custom_call.1} parent=0
    #allocation4 [shape = 'u8[512]{0}', space=vmem, size = 0x400, scoped, tag = 'output window, operand 0, single buffered']
    #allocation5 [shape = 's32[1]{0}', space=sflag, size = 0x4, scoped, tag = 'scoped memory for tpu_custom_call.1']
    %13 = vsyncpa [#allocation5], 0
    // Predicated region
    $region2: #{tpu_custom_call.1} parent=1 // pred_check
      _
    $region3: #{tpu_custom_call.1} parent=1 // pred_check_branch
      %15 = sbr.rel (0) target = $region5
    $region4: #{tpu_custom_call.1} parent=1 // pred_region
      _
    $region5: #{tpu_custom_call.1} parent=1 // pred_fallthru
      _
    // Predicated region
    $region6: #{tpu_custom_call.1} parent=1 // pred_check
      _
    $region7: #{tpu_custom_call.1} parent=1 // pred_check_branch
      %17 = sbr.rel (0) target = $region9
    $region8: #{tpu_custom_call.1} parent=1 // pred_region
      _
    $region9: #{tpu_custom_call.1} parent=1 // pred_fallthru
      _
    // Predicated region
    $region10: #{tpu_custom_call.1} parent=1 // pred_check
      _
    $region11: #{tpu_custom_call.1} parent=1 // pred_check_branch
      %19 = sbr.rel (0) target = $region13
    $region12: #{tpu_custom_call.1} parent=1 // pred_region
      _
    $region13: #{tpu_custom_call.1} parent=1 // pred_fallthru
      _
    // Predicated region
    $region14: #{tpu_custom_call.1} parent=1 // pred_check
      _
    $region15: #{tpu_custom_call.1} parent=1 // pred_check_branch
      %21 = sbr.rel (0) target = $region17
    $region16: #{tpu_custom_call.1} parent=1 // pred_region
      _
    $region17: #{tpu_custom_call.1} parent=1 // pred_fallthru
      _
    // Predicated region
    $region18: #{tpu_custom_call.1} parent=1 // pred_check
      _
    $region19: #{tpu_custom_call.1} parent=1 // pred_check_branch
      %23 = sbr.rel (0) target = $region21
    $region20: #{tpu_custom_call.1} parent=1 // pred_region
      _
    $region21: #{tpu_custom_call.1} parent=1 // pred_fallthru
      _
    // Predicated region
    $region22: #{tpu_custom_call.1} parent=1 // pred_check
      _
    $region23: #{tpu_custom_call.1} parent=1 // pred_check_branch
      %25 = sbr.rel (0) target = $region25
    $region24: #{tpu_custom_call.1} parent=1 // pred_region
      _
    $region25: #{tpu_custom_call.1} parent=1 // pred_fallthru
      _
    %p26 = scmp.eq.s32.totalorder 0, 0
    // Predicated region
    $region26: #{tpu_custom_call.1} parent=1 // pred_check
      %p27 = pneg %p26
    $region27: #{tpu_custom_call.1} parent=1 // pred_check_branch
      %29 = sbr.rel (%p27) target = $region29
    $region28: #{tpu_custom_call.1} parent=1 // pred_region
      %vm30 = vcmask 15360
      %31 = vst.msk [vmem:[#allocation2] sm:$0xff] %vm30, 0.0
      %32 = vst.msk [vmem:[#allocation2 + $0x8] sm:$0xff] %vm30, 0.0
      %33 = vst.msk [vmem:[#allocation2 + $0x10] sm:$0xff] %vm30, 0.0
      %34 = vst.msk [vmem:[#allocation2 + $0x18] sm:$0xff] %vm30, 0.0
      %35 = vst.msk [vmem:[#allocation2 + $0x20] sm:$0xff] %vm30, 0.0
      %36 = vst.msk [vmem:[#allocation2 + $0x28] sm:$0xff] %vm30, 0.0
      %37 = vst.msk [vmem:[#allocation2 + $0x30] sm:$0xff] %vm30, 0.0
      %38 = vst.msk [vmem:[#allocation2 + $0x38] sm:$0xff] %vm30, 0.0
    $region29: #{tpu_custom_call.1} parent=1 // pred_fallthru
      _
    %v39 = vld [vmem:[%s1] sm:$0xff]
    %v40 = vld [vmem:[%s1 + $0x8] sm:$0xff]
    %v41 = vld [vmem:[%s1 + $0x10] sm:$0xff]
    %v42 = vld [vmem:[%s1 + $0x18] sm:$0xff]
    %v43 = vld [vmem:[%s1 + $0x20] sm:$0xff]
    %v44 = vld [vmem:[%s1 + $0x28] sm:$0xff]
    %v45 = vld [vmem:[%s1 + $0x30] sm:$0xff]
    %v46 = vld [vmem:[%s1 + $0x38] sm:$0xff]
    %v47 = vld [vmem:[%s2] sm:$0xff]
    %v48 = vld [vmem:[%s2 + $0x8] sm:$0xff]
    %v49 = vld [vmem:[%s2 + $0x10] sm:$0xff]
    %v50 = vld [vmem:[%s2 + $0x18] sm:$0xff]
    %v51 = vld [vmem:[%s2 + $0x20] sm:$0xff]
    %v52 = vld [vmem:[%s2 + $0x28] sm:$0xff]
    %v53 = vld [vmem:[%s2 + $0x30] sm:$0xff]
    %v54 = vld [vmem:[%s2 + $0x38] sm:$0xff]
    %v55 = vld [vmem:[%s3] sm:$0xff]
    %v56 = vld [vmem:[%s3 + $0x8] sm:$0xff]
    %v57 = vld [vmem:[%s3 + $0x10] sm:$0xff]
    %v58 = vld [vmem:[%s3 + $0x18] sm:$0xff]
    %v59 = vld [vmem:[%s3 + $0x20] sm:$0xff]
    %v60 = vld [vmem:[%s3 + $0x28] sm:$0xff]
    %v61 = vld [vmem:[%s3 + $0x30] sm:$0xff]
    %v62 = vld [vmem:[%s3 + $0x38] sm:$0xff]
    %v63 = vld [vmem:[#allocation2] sm:$0xff]
    %v64 = vld [vmem:[#allocation2 + $0x8] sm:$0xff]
    %v65 = vld [vmem:[#allocation2 + $0x10] sm:$0xff]
    %v66 = vld [vmem:[#allocation2 + $0x18] sm:$0xff]
    %v67 = vld [vmem:[#allocation2 + $0x20] sm:$0xff]
    %v68 = vld [vmem:[#allocation2 + $0x28] sm:$0xff]
    %v69 = vld [vmem:[#allocation2 + $0x30] sm:$0xff]
    %v70 = vld [vmem:[#allocation2 + $0x38] sm:$0xff]
    %v71 = vld [vmem:[%s0] sm:$0x1]
    %73 = vset.pattern.permute.xlu0 0
    %74 = vperm.xlu0 %73, %v39
    %v75 = vpop.permute.xlu0 %74
    %78 = vset.pattern.permute.xlu0 0
    %79 = vperm.xlu0 %78, %v40
    %v80 = vpop.permute.xlu0 %79
    %83 = vset.pattern.permute.xlu0 0
    %84 = vperm.xlu0 %83, %v41
    %v85 = vpop.permute.xlu0 %84
    %88 = vset.pattern.permute.xlu0 0
    %89 = vperm.xlu0 %88, %v42
    %v90 = vpop.permute.xlu0 %89
    %93 = vset.pattern.permute.xlu0 0
    %94 = vperm.xlu0 %93, %v43
    %v95 = vpop.permute.xlu0 %94
    %98 = vset.pattern.permute.xlu0 0
    %99 = vperm.xlu0 %98, %v44
    %v100 = vpop.permute.xlu0 %99
    %103 = vset.pattern.permute.xlu0 0
    %104 = vperm.xlu0 %103, %v45
    %v105 = vpop.permute.xlu0 %104
    %108 = vset.pattern.permute.xlu0 0
    %109 = vperm.xlu0 %108, %v46
    %v110 = vpop.permute.xlu0 %109
    %v112 = vlaneseq
    %v113 = vshrl.u32 %v112, 7
    %v114 = vsub.s32 0, %v113
    %v115 = vrot.slane %v71, %v114
    %v116 = vmul.f32 %v75, %v115
    %v117 = vmul.f32 %v80, %v115
    %v118 = vmul.f32 %v85, %v115
    %v119 = vmul.f32 %v90, %v115
    %v120 = vmul.f32 %v95, %v115
    %v121 = vmul.f32 %v100, %v115
    %v122 = vmul.f32 %v105, %v115
    %v123 = vmul.f32 %v110, %v115
    %125 = vset.pattern.permute.xlu0 0
    %126 = vperm.xlu0 %125, %v55
    %v127 = vpop.permute.xlu0 %126
    %130 = vset.pattern.permute.xlu0 0
    %131 = vperm.xlu0 %130, %v56
    %v132 = vpop.permute.xlu0 %131
    %135 = vset.pattern.permute.xlu0 0
    %136 = vperm.xlu0 %135, %v57
    %v137 = vpop.permute.xlu0 %136
    %140 = vset.pattern.permute.xlu0 0
    %141 = vperm.xlu0 %140, %v58
    %v142 = vpop.permute.xlu0 %141
    %145 = vset.pattern.permute.xlu0 0
    %146 = vperm.xlu0 %145, %v59
    %v147 = vpop.permute.xlu0 %146
    %150 = vset.pattern.permute.xlu0 0
    %151 = vperm.xlu0 %150, %v60
    %v152 = vpop.permute.xlu0 %151
    %155 = vset.pattern.permute.xlu0 0
    %156 = vperm.xlu0 %155, %v61
    %v157 = vpop.permute.xlu0 %156
    %160 = vset.pattern.permute.xlu0 0
    %161 = vperm.xlu0 %160, %v62
    %v162 = vpop.permute.xlu0 %161
    %v164 = vadd.f32 %v116, %v127
    %v165 = vadd.f32 %v117, %v132
    %v166 = vadd.f32 %v118, %v137
    %v167 = vadd.f32 %v119, %v142
    %v168 = vadd.f32 %v120, %v147
    %v169 = vadd.f32 %v121, %v152
    %v170 = vadd.f32 %v122, %v157
    %v171 = vadd.f32 %v123, %v162
    %vm172 = vcmask 523264
    %v174 = vsel %vm172, %v47, 0
    %v177 = vsel %vm172, %v48, 0
    %v180 = vsel %vm172, %v49, 0
    %v183 = vsel %vm172, %v50, 0
    %v186 = vsel %vm172, %v51, 0
    %v189 = vsel %vm172, %v52, 0
    %v192 = vsel %vm172, %v53, 0
    %v195 = vsel %vm172, %v54, 0
    %197 = vmatprep.subr.mxu0 0.0
    %198 = vmatpush1.msra.mxu0 %v63
    %199 = vmatprep.subr.mxu0 0.0
    %200 = vmatpush1.msra.mxu0 %v64
    %201 = vmatprep.subr.mxu0 0.0
    %202 = vmatpush1.msra.mxu0 %v65
    %203 = vmatprep.subr.mxu0 0.0
    %204 = vmatpush1.msra.mxu0 %v66
    %205 = vmatprep.subr.mxu0 0.0
    %206 = vmatpush1.msra.mxu0 %v67
    %207 = vmatprep.subr.mxu0 0.0
    %208 = vmatpush1.msra.mxu0 %v68
    %209 = vmatprep.subr.mxu0 0.0
    %210 = vmatpush1.msra.mxu0 %v69
    %211 = vmatprep.subr.mxu0 0.0
    %212 = vmatpush1.msra.mxu0 %v70
    %213 = vmatprep.subr.mxu0 0.0
    %214 = vmatpush1.msra.mxu0 0.0
    %215 = vmatprep.subr.mxu0 0.0
    %216 = vmatpush1.msra.mxu0 0.0
    %217 = vmatprep.subr.mxu0 0.0
    %218 = vmatpush1.msra.mxu0 0.0
    %219 = vmatprep.subr.mxu0 0.0
    %220 = vmatpush1.msra.mxu0 0.0
    %221 = vmatprep.subr.mxu0 0.0
    %222 = vmatpush1.msra.mxu0 0.0
    %223 = vmatprep.subr.mxu0 0.0
    %224 = vmatpush1.msra.mxu0 0.0
    %225 = vmatprep.subr.mxu0 0.0
    %226 = vmatpush1.msra.mxu0 0.0
    %227 = vmatprep.subr.mxu0 0.0
    %228 = vmatpush1.msra.mxu0 0.0
    %229 = vmatprep.subr.mxu0 0.0
    %230 = vmatpush1.msra.mxu0 0.0
    %231 = vmatprep.subr.mxu0 0.0
    %232 = vmatpush1.msra.mxu0 0.0
    %233 = vmatprep.subr.mxu0 0.0
    %234 = vmatpush1.msra.mxu0 0.0
    %235 = vmatprep.subr.mxu0 0.0
    %236 = vmatpush1.msra.mxu0 0.0
    %237 = vmatprep.subr.mxu0 0.0
    %238 = vmatpush1.msra.mxu0 0.0
    %239 = vmatprep.subr.mxu0 0.0
    %240 = vmatpush1.msra.mxu0 0.0
    %241 = vmatprep.subr.mxu0 0.0
    %242 = vmatpush1.msra.mxu0 0.0
    %243 = vmatprep.subr.mxu0 0.0
    %244 = vmatpush1.msra.mxu0 0.0
    %245 = vmatprep.subr.mxu0 0.0
    %246 = vmatpush1.msra.mxu0 0.0
    %247 = vmatprep.subr.mxu0 0.0
    %248 = vmatpush1.msra.mxu0 0.0
    %249 = vmatprep.subr.mxu0 0.0
    %250 = vmatpush1.msra.mxu0 0.0
    %251 = vmatprep.subr.mxu0 0.0
    %252 = vmatpush1.msra.mxu0 0.0
    %253 = vmatprep.subr.mxu0 0.0
    %254 = vmatpush1.msra.mxu0 0.0
    %255 = vmatprep.subr.mxu0 0.0
    %256 = vmatpush1.msra.mxu0 0.0
    %257 = vmatprep.subr.mxu0 0.0
    %258 = vmatpush1.msra.mxu0 0.0
    %259 = vmatprep.subr.mxu0 0.0
    %260 = vmatpush1.msra.mxu0 0.0
    %261 = vmatprep.mubr.f32.mxu0 0.0
    %262 = vmatmul.mubr.f32.gmra.mrb[0].mxu0 %v174
    %v263 = vpop.f32.mrb[0].mxu0
    %v264 = vadd.f32 0.0, %v263
    %v265 = vpop.f32.mrb[0].mxu0
    %266 = vmatprep.mubr.f32.mxu0 0.0
    %267 = vmatmul.mubr.f32.gmra.mrb[0].mxu0 %v177
    %v268 = vpop.f32.mrb[0].mxu0
    %v269 = vadd.f32 0.0, %v268
    %v270 = vpop.f32.mrb[0].mxu0
    %271 = vmatprep.mubr.f32.mxu0 0.0
    %272 = vmatmul.mubr.f32.gmra.mrb[0].mxu0 %v180
    %v273 = vpop.f32.mrb[0].mxu0
    %v274 = vadd.f32 0.0, %v273
    %v275 = vpop.f32.mrb[0].mxu0
    %276 = vmatprep.mubr.f32.mxu0 0.0
    %277 = vmatmul.mubr.f32.gmra.mrb[0].mxu0 %v183
    %v278 = vpop.f32.mrb[0].mxu0
    %v279 = vadd.f32 0.0, %v278
    %v280 = vpop.f32.mrb[0].mxu0
    %281 = vmatprep.mubr.f32.mxu0 0.0
    %282 = vmatmul.mubr.f32.gmra.mrb[0].mxu0 %v186
    %v283 = vpop.f32.mrb[0].mxu0
    %v284 = vadd.f32 0.0, %v283
    %v285 = vpop.f32.mrb[0].mxu0
    %286 = vmatprep.mubr.f32.mxu0 0.0
    %287 = vmatmul.mubr.f32.gmra.mrb[0].mxu0 %v189
    %v288 = vpop.f32.mrb[0].mxu0
    %v289 = vadd.f32 0.0, %v288
    %v290 = vpop.f32.mrb[0].mxu0
    %291 = vmatprep.mubr.f32.mxu0 0.0
    %292 = vmatmul.mubr.f32.gmra.mrb[0].mxu0 %v192
    %v293 = vpop.f32.mrb[0].mxu0
    %v294 = vadd.f32 0.0, %v293
    %v295 = vpop.f32.mrb[0].mxu0
    %296 = vmatprep.mubr.f32.mxu0 0.0
    %297 = vmatmul.mubr.f32.gmra.mrb[0].mxu0 %v195
    %v298 = vpop.f32.mrb[0].mxu0
    %v299 = vadd.f32 0.0, %v298
    %v300 = vpop.f32.mrb[0].mxu0
    %301 = vdwg.mxu0
    %v302 = vadd.f32 %v164, %v264
    %v303 = vadd.f32 %v165, %v269
    %v304 = vadd.f32 %v166, %v274
    %v305 = vadd.f32 %v167, %v279
    %v306 = vadd.f32 %v168, %v284
    %v307 = vadd.f32 %v169, %v289
    %v308 = vadd.f32 %v170, %v294
    %v309 = vadd.f32 %v171, %v299
    %v310 = vtanh.pop %v302
    %v311 = vtanh.pop %v303
    %v312 = vtanh.pop %v304
    %v313 = vtanh.pop %v305
    %v314 = vtanh.pop %v306
    %v315 = vtanh.pop %v307
    %v316 = vtanh.pop %v308
    %v317 = vtanh.pop %v309
    %v318 = vld [vmem:[%s0 + $0x1] sm:$0x1]
    %v319 = vlaneseq
    %v320 = vshrl.u32 %v319, 7
    %v321 = vsub.s32 0, %v320
    %v322 = vrot.slane %v318, %v321
    %v323 = vmul.f32 %v75, %v322
    %v324 = vmul.f32 %v80, %v322
    %v325 = vmul.f32 %v85, %v322
    %v326 = vmul.f32 %v90, %v322
    %v327 = vmul.f32 %v95, %v322
    %v328 = vmul.f32 %v100, %v322
    %v329 = vmul.f32 %v105, %v322
    %v330 = vmul.f32 %v110, %v322
    %v331 = vadd.f32 %v323, %v127
    %v332 = vadd.f32 %v324, %v132
    %v333 = vadd.f32 %v325, %v137
    %v334 = vadd.f32 %v326, %v142
    %v335 = vadd.f32 %v327, %v147
    %v336 = vadd.f32 %v328, %v152
    %v337 = vadd.f32 %v329, %v157
    %v338 = vadd.f32 %v330, %v162
    %339 = vmatprep.subr.mxu0 0.0
    %340 = vmatpush1.msra.mxu0 %v310
    %341 = vmatprep.subr.mxu0 0.0
    %342 = vmatpush1.msra.mxu0 %v311
    %343 = vmatprep.subr.mxu0 0.0
    %344 = vmatpush1.msra.mxu0 %v312
    %345 = vmatprep.subr.mxu0 0.0
    %346 = vmatpush1.msra.mxu0 %v313
    %347 = vmatprep.subr.mxu0 0.0
    %348 = vmatpush1.msra.mxu0 %v314
    %349 = vmatprep.subr.mxu0 0.0
    %350 = vmatpush1.msra.mxu0 %v315
    %351 = vmatprep.subr.mxu0 0.0
    %352 = vmatpush1.msra.mxu0 %v316
    %353 = vmatprep.subr.mxu0 0.0
    %354 = vmatpush1.msra.mxu0 %v317
    %355 = vmatprep.subr.mxu0 0.0
    %356 = vmatpush1.msra.mxu0 0.0
    %357 = vmatprep.subr.mxu0 0.0
    %358 = vmatpush1.msra.mxu0 0.0
    %359 = vmatprep.subr.mxu0 0.0
    %360 = vmatpush1.msra.mxu0 0.0
    %361 = vmatprep.subr.mxu0 0.0
    %362 = vmatpush1.msra.mxu0 0.0
    %363 = vmatprep.subr.mxu0 0.0
    %364 = vmatpush1.msra.mxu0 0.0
    %365 = vmatprep.subr.mxu0 0.0
    %366 = vmatpush1.msra.mxu0 0.0
    %367 = vmatprep.subr.mxu0 0.0
    %368 = vmatpush1.msra.mxu0 0.0
    %369 = vmatprep.subr.mxu0 0.0
    %370 = vmatpush1.msra.mxu0 0.0
    %371 = vmatprep.subr.mxu0 0.0
    %372 = vmatpush1.msra.mxu0 0.0
    %373 = vmatprep.subr.mxu0 0.0
    %374 = vmatpush1.msra.mxu0 0.0
    %375 = vmatprep.subr.mxu0 0.0
    %376 = vmatpush1.msra.mxu0 0.0
    %377 = vmatprep.subr.mxu0 0.0
    %378 = vmatpush1.msra.mxu0 0.0
    %379 = vmatprep.subr.mxu0 0.0
    %380 = vmatpush1.msra.mxu0 0.0
    %381 = vmatprep.subr.mxu0 0.0
    %382 = vmatpush1.msra.mxu0 0.0
    %383 = vmatprep.subr.mxu0 0.0
    %384 = vmatpush1.msra.mxu0 0.0
    %385 = vmatprep.subr.mxu0 0.0
    %386 = vmatpush1.msra.mxu0 0.0
    %387 = vmatprep.subr.mxu0 0.0
    %388 = vmatpush1.msra.mxu0 0.0
    %389 = vmatprep.subr.mxu0 0.0
    %390 = vmatpush1.msra.mxu0 0.0
    %391 = vmatprep.subr.mxu0 0.0
    %392 = vmatpush1.msra.mxu0 0.0
    %393 = vmatprep.subr.mxu0 0.0
    %394 = vmatpush1.msra.mxu0 0.0
    %395 = vmatprep.subr.mxu0 0.0
    %396 = vmatpush1.msra.mxu0 0.0
    %397 = vmatprep.subr.mxu0 0.0
    %398 = vmatpush1.msra.mxu0 0.0
    %399 = vmatprep.subr.mxu0 0.0
    %400 = vmatpush1.msra.mxu0 0.0
    %401 = vmatprep.subr.mxu0 0.0
    %402 = vmatpush1.msra.mxu0 0.0
    %403 = vmatprep.mubr.f32.mxu0 0.0
    %404 = vmatmul.mubr.f32.gmra.mrb[0].mxu0 %v174
    %v405 = vpop.f32.mrb[0].mxu0
    %v406 = vadd.f32 0.0, %v405
    %v407 = vpop.f32.mrb[0].mxu0
    %408 = vmatprep.mubr.f32.mxu0 0.0
    %409 = vmatmul.mubr.f32.gmra.mrb[0].mxu0 %v177
    %v410 = vpop.f32.mrb[0].mxu0
    %v411 = vadd.f32 0.0, %v410
    %v412 = vpop.f32.mrb[0].mxu0
    %413 = vmatprep.mubr.f32.mxu0 0.0
    %414 = vmatmul.mubr.f32.gmra.mrb[0].mxu0 %v180
    %v415 = vpop.f32.mrb[0].mxu0
    %v416 = vadd.f32 0.0, %v415
    %v417 = vpop.f32.mrb[0].mxu0
    %418 = vmatprep.mubr.f32.mxu0 0.0
    %419 = vmatmul.mubr.f32.gmra.mrb[0].mxu0 %v183
    %v420 = vpop.f32.mrb[0].mxu0
    %v421 = vadd.f32 0.0, %v420
    %v422 = vpop.f32.mrb[0].mxu0
    %423 = vmatprep.mubr.f32.mxu0 0.0
    %424 = vmatmul.mubr.f32.gmra.mrb[0].mxu0 %v186
    %v425 = vpop.f32.mrb[0].mxu0
    %v426 = vadd.f32 0.0, %v425
    %v427 = vpop.f32.mrb[0].mxu0
    %428 = vmatprep.mubr.f32.mxu0 0.0
    %429 = vmatmul.mubr.f32.gmra.mrb[0].mxu0 %v189
    %v430 = vpop.f32.mrb[0].mxu0
    %v431 = vadd.f32 0.0, %v430
    %v432 = vpop.f32.mrb[0].mxu0
    %433 = vmatprep.mubr.f32.mxu0 0.0
    %434 = vmatmul.mubr.f32.gmra.mrb[0].mxu0 %v192
    %v435 = vpop.f32.mrb[0].mxu0
    %v436 = vadd.f32 0.0, %v435
    %v437 = vpop.f32.mrb[0].mxu0
    %438 = vmatprep.mubr.f32.mxu0 0.0
    %439 = vmatmul.mubr.f32.gmra.mrb[0].mxu0 %v195
    %v440 = vpop.f32.mrb[0].mxu0
    %v441 = vadd.f32 0.0, %v440
    %v442 = vpop.f32.mrb[0].mxu0
    %443 = vdwg.mxu0
    %v444 = vadd.f32 %v331, %v406
    %v445 = vadd.f32 %v332, %v411
    %v446 = vadd.f32 %v333, %v416
    %v447 = vadd.f32 %v334, %v421
    %v448 = vadd.f32 %v335, %v426
    %v449 = vadd.f32 %v336, %v431
    %v450 = vadd.f32 %v337, %v436
    %v451 = vadd.f32 %v338, %v441
    %v452 = vtanh.pop %v444
    %v453 = vtanh.pop %v445
    %v454 = vtanh.pop %v446
    %v455 = vtanh.pop %v447
    %v456 = vtanh.pop %v448
    %v457 = vtanh.pop %v449
    %v458 = vtanh.pop %v450
    %v459 = vtanh.pop %v451
    %v460 = vld [vmem:[%s0 + $0x2] sm:$0x1]
    %v461 = vlaneseq
    %v462 = vshrl.u32 %v461, 7
    %v463 = vsub.s32 0, %v462
    %v464 = vrot.slane %v460, %v463
    %v465 = vmul.f32 %v75, %v464
    %v466 = vmul.f32 %v80, %v464
    %v467 = vmul.f32 %v85, %v464
    %v468 = vmul.f32 %v90, %v464
    %v469 = vmul.f32 %v95, %v464
    %v470 = vmul.f32 %v100, %v464
    %v471 = vmul.f32 %v105, %v464
    %v472 = vmul.f32 %v110, %v464
    %v473 = vadd.f32 %v465, %v127
    %v474 = vadd.f32 %v466, %v132
    %v475 = vadd.f32 %v467, %v137
    %v476 = vadd.f32 %v468, %v142
    %v477 = vadd.f32 %v469, %v147
    %v478 = vadd.f32 %v470, %v152
    %v479 = vadd.f32 %v471, %v157
    %v480 = vadd.f32 %v472, %v162
    %481 = vmatprep.subr.mxu0 0.0
    %482 = vmatpush1.msra.mxu0 %v452
    %483 = vmatprep.subr.mxu0 0.0
    %484 = vmatpush1.msra.mxu0 %v453
    %485 = vmatprep.subr.mxu0 0.0
    %486 = vmatpush1.msra.mxu0 %v454
    %487 = vmatprep.subr.mxu0 0.0
    %488 = vmatpush1.msra.mxu0 %v455
    %489 = vmatprep.subr.mxu0 0.0
    %490 = vmatpush1.msra.mxu0 %v456
    %491 = vmatprep.subr.mxu0 0.0
    %492 = vmatpush1.msra.mxu0 %v457
    %493 = vmatprep.subr.mxu0 0.0
    %494 = vmatpush1.msra.mxu0 %v458
    %495 = vmatprep.subr.mxu0 0.0
    %496 = vmatpush1.msra.mxu0 %v459
    %497 = vmatprep.subr.mxu0 0.0
    %498 = vmatpush1.msra.mxu0 0.0
    %499 = vmatprep.subr.mxu0 0.0
    %500 = vmatpush1.msra.mxu0 0.0
    %501 = vmatprep.subr.mxu0 0.0
    %502 = vmatpush1.msra.mxu0 0.0
    %503 = vmatprep.subr.mxu0 0.0
    %504 = vmatpush1.msra.mxu0 0.0
    %505 = vmatprep.subr.mxu0 0.0
    %506 = vmatpush1.msra.mxu0 0.0
    %507 = vmatprep.subr.mxu0 0.0
    %508 = vmatpush1.msra.mxu0 0.0
    %509 = vmatprep.subr.mxu0 0.0
    %510 = vmatpush1.msra.mxu0 0.0
    %511 = vmatprep.subr.mxu0 0.0
    %512 = vmatpush1.msra.mxu0 0.0
    %513 = vmatprep.subr.mxu0 0.0
    %514 = vmatpush1.msra.mxu0 0.0
    %515 = vmatprep.subr.mxu0 0.0
    %516 = vmatpush1.msra.mxu0 0.0
    %517 = vmatprep.subr.mxu0 0.0
    %518 = vmatpush1.msra.mxu0 0.0
    %519 = vmatprep.subr.mxu0 0.0
    %520 = vmatpush1.msra.mxu0 0.0
    %521 = vmatprep.subr.mxu0 0.0
    %522 = vmatpush1.msra.mxu0 0.0
    %523 = vmatprep.subr.mxu0 0.0
    %524 = vmatpush1.msra.mxu0 0.0
    %525 = vmatprep.subr.mxu0 0.0
    %526 = vmatpush1.msra.mxu0 0.0
    %527 = vmatprep.subr.mxu0 0.0
    %528 = vmatpush1.msra.mxu0 0.0
    %529 = vmatprep.subr.mxu0 0.0
    %530 = vmatpush1.msra.mxu0 0.0
    %531 = vmatprep.subr.mxu0 0.0
    %532 = vmatpush1.msra.mxu0 0.0
    %533 = vmatprep.subr.mxu0 0.0
    %534 = vmatpush1.msra.mxu0 0.0
    %535 = vmatprep.subr.mxu0 0.0
    %536 = vmatpush1.msra.mxu0 0.0
    %537 = vmatprep.subr.mxu0 0.0
    %538 = vmatpush1.msra.mxu0 0.0
    %539 = vmatprep.subr.mxu0 0.0
    %540 = vmatpush1.msra.mxu0 0.0
    %541 = vmatprep.subr.mxu0 0.0
    %542 = vmatpush1.msra.mxu0 0.0
    %543 = vmatprep.subr.mxu0 0.0
    %544 = vmatpush1.msra.mxu0 0.0
    %545 = vmatprep.mubr.f32.mxu0 0.0
    %546 = vmatmul.mubr.f32.gmra.mrb[0].mxu0 %v174
    %v547 = vpop.f32.mrb[0].mxu0
    %v548 = vadd.f32 0.0, %v547
    %v549 = vpop.f32.mrb[0].mxu0
    %550 = vmatprep.mubr.f32.mxu0 0.0
    %551 = vmatmul.mubr.f32.gmra.mrb[0].mxu0 %v177
    %v552 = vpop.f32.mrb[0].mxu0
    %v553 = vadd.f32 0.0, %v552
    %v554 = vpop.f32.mrb[0].mxu0
    %555 = vmatprep.mubr.f32.mxu0 0.0
    %556 = vmatmul.mubr.f32.gmra.mrb[0].mxu0 %v180
    %v557 = vpop.f32.mrb[0].mxu0
    %v558 = vadd.f32 0.0, %v557
    %v559 = vpop.f32.mrb[0].mxu0
    %560 = vmatprep.mubr.f32.mxu0 0.0
    %561 = vmatmul.mubr.f32.gmra.mrb[0].mxu0 %v183
    %v562 = vpop.f32.mrb[0].mxu0
    %v563 = vadd.f32 0.0, %v562
    %v564 = vpop.f32.mrb[0].mxu0
    %565 = vmatprep.mubr.f32.mxu0 0.0
    %566 = vmatmul.mubr.f32.gmra.mrb[0].mxu0 %v186
    %v567 = vpop.f32.mrb[0].mxu0
    %v568 = vadd.f32 0.0, %v567
    %v569 = vpop.f32.mrb[0].mxu0
    %570 = vmatprep.mubr.f32.mxu0 0.0
    %571 = vmatmul.mubr.f32.gmra.mrb[0].mxu0 %v189
    %v572 = vpop.f32.mrb[0].mxu0
    %v573 = vadd.f32 0.0, %v572
    %v574 = vpop.f32.mrb[0].mxu0
    %575 = vmatprep.mubr.f32.mxu0 0.0
    %576 = vmatmul.mubr.f32.gmra.mrb[0].mxu0 %v192
    %v577 = vpop.f32.mrb[0].mxu0
    %v578 = vadd.f32 0.0, %v577
    %v579 = vpop.f32.mrb[0].mxu0
    %580 = vmatprep.mubr.f32.mxu0 0.0
    %581 = vmatmul.mubr.f32.gmra.mrb[0].mxu0 %v195
    %v582 = vpop.f32.mrb[0].mxu0
    %v583 = vadd.f32 0.0, %v582
    %v584 = vpop.f32.mrb[0].mxu0
    %585 = vdwg.mxu0
    %v586 = vadd.f32 %v473, %v548
    %v587 = vadd.f32 %v474, %v553
    %v588 = vadd.f32 %v475, %v558
    %v589 = vadd.f32 %v476, %v563
    %v590 = vadd.f32 %v477, %v568
    %v591 = vadd.f32 %v478, %v573
    %v592 = vadd.f32 %v479, %v578
    %v593 = vadd.f32 %v480, %v583
    %v594 = vtanh.pop %v586
    %v595 = vtanh.pop %v587
    %v596 = vtanh.pop %v588
    %v597 = vtanh.pop %v589
    %v598 = vtanh.pop %v590
    %v599 = vtanh.pop %v591
    %v600 = vtanh.pop %v592
    %v601 = vtanh.pop %v593
    %v602 = vld [vmem:[%s0 + $0x3] sm:$0x1]
    %v603 = vlaneseq
    %v604 = vshrl.u32 %v603, 7
    %v605 = vsub.s32 0, %v604
    %v606 = vrot.slane %v602, %v605
    %v607 = vmul.f32 %v75, %v606
    %v608 = vmul.f32 %v80, %v606
    %v609 = vmul.f32 %v85, %v606
    %v610 = vmul.f32 %v90, %v606
    %v611 = vmul.f32 %v95, %v606
    %v612 = vmul.f32 %v100, %v606
    %v613 = vmul.f32 %v105, %v606
    %v614 = vmul.f32 %v110, %v606
    %v615 = vadd.f32 %v607, %v127
    %v616 = vadd.f32 %v608, %v132
    %v617 = vadd.f32 %v609, %v137
    %v618 = vadd.f32 %v610, %v142
    %v619 = vadd.f32 %v611, %v147
    %v620 = vadd.f32 %v612, %v152
    %v621 = vadd.f32 %v613, %v157
    %v622 = vadd.f32 %v614, %v162
    %623 = vmatprep.subr.mxu0 0.0
    %624 = vmatpush1.msra.mxu0 %v594
    %625 = vmatprep.subr.mxu0 0.0
    %626 = vmatpush1.msra.mxu0 %v595
    %627 = vmatprep.subr.mxu0 0.0
    %628 = vmatpush1.msra.mxu0 %v596
    %629 = vmatprep.subr.mxu0 0.0
    %630 = vmatpush1.msra.mxu0 %v597
    %631 = vmatprep.subr.mxu0 0.0
    %632 = vmatpush1.msra.mxu0 %v598
    %633 = vmatprep.subr.mxu0 0.0
    %634 = vmatpush1.msra.mxu0 %v599
    %635 = vmatprep.subr.mxu0 0.0
    %636 = vmatpush1.msra.mxu0 %v600
    %637 = vmatprep.subr.mxu0 0.0
    %638 = vmatpush1.msra.mxu0 %v601
    %639 = vmatprep.subr.mxu0 0.0
    %640 = vmatpush1.msra.mxu0 0.0
    %641 = vmatprep.subr.mxu0 0.0
    %642 = vmatpush1.msra.mxu0 0.0
    %643 = vmatprep.subr.mxu0 0.0
    %644 = vmatpush1.msra.mxu0 0.0
    %645 = vmatprep.subr.mxu0 0.0
    %646 = vmatpush1.msra.mxu0 0.0
    %647 = vmatprep.subr.mxu0 0.0
    %648 = vmatpush1.msra.mxu0 0.0
    %649 = vmatprep.subr.mxu0 0.0
    %650 = vmatpush1.msra.mxu0 0.0
    %651 = vmatprep.subr.mxu0 0.0
    %652 = vmatpush1.msra.mxu0 0.0
    %653 = vmatprep.subr.mxu0 0.0
    %654 = vmatpush1.msra.mxu0 0.0
    %655 = vmatprep.subr.mxu0 0.0
    %656 = vmatpush1.msra.mxu0 0.0
    %657 = vmatprep.subr.mxu0 0.0
    %658 = vmatpush1.msra.mxu0 0.0
    %659 = vmatprep.subr.mxu0 0.0
    %660 = vmatpush1.msra.mxu0 0.0
    %661 = vmatprep.subr.mxu0 0.0
    %662 = vmatpush1.msra.mxu0 0.0
    %663 = vmatprep.subr.mxu0 0.0
    %664 = vmatpush1.msra.mxu0 0.0
    %665 = vmatprep.subr.mxu0 0.0
    %666 = vmatpush1.msra.mxu0 0.0
    %667 = vmatprep.subr.mxu0 0.0
    %668 = vmatpush1.msra.mxu0 0.0
    %669 = vmatprep.subr.mxu0 0.0
    %670 = vmatpush1.msra.mxu0 0.0
    %671 = vmatprep.subr.mxu0 0.0
    %672 = vmatpush1.msra.mxu0 0.0
    %673 = vmatprep.subr.mxu0 0.0
    %674 = vmatpush1.msra.mxu0 0.0
    %675 = vmatprep.subr.mxu0 0.0
    %676 = vmatpush1.msra.mxu0 0.0
    %677 = vmatprep.subr.mxu0 0.0
    %678 = vmatpush1.msra.mxu0 0.0
    %679 = vmatprep.subr.mxu0 0.0
    %680 = vmatpush1.msra.mxu0 0.0
    %681 = vmatprep.subr.mxu0 0.0
    %682 = vmatpush1.msra.mxu0 0.0
    %683 = vmatprep.subr.mxu0 0.0
    %684 = vmatpush1.msra.mxu0 0.0
    %685 = vmatprep.subr.mxu0 0.0
    %686 = vmatpush1.msra.mxu0 0.0
    %687 = vmatprep.mubr.f32.mxu0 0.0
    %688 = vmatmul.mubr.f32.gmra.mrb[0].mxu0 %v174
    %v689 = vpop.f32.mrb[0].mxu0
    %v690 = vadd.f32 0.0, %v689
    %v691 = vpop.f32.mrb[0].mxu0
    %692 = vmatprep.mubr.f32.mxu0 0.0
    %693 = vmatmul.mubr.f32.gmra.mrb[0].mxu0 %v177
    %v694 = vpop.f32.mrb[0].mxu0
    %v695 = vadd.f32 0.0, %v694
    %v696 = vpop.f32.mrb[0].mxu0
    %697 = vmatprep.mubr.f32.mxu0 0.0
    %698 = vmatmul.mubr.f32.gmra.mrb[0].mxu0 %v180
    %v699 = vpop.f32.mrb[0].mxu0
    %v700 = vadd.f32 0.0, %v699
    %v701 = vpop.f32.mrb[0].mxu0
    %702 = vmatprep.mubr.f32.mxu0 0.0
    %703 = vmatmul.mubr.f32.gmra.mrb[0].mxu0 %v183
    %v704 = vpop.f32.mrb[0].mxu0
    %v705 = vadd.f32 0.0, %v704
    %v706 = vpop.f32.mrb[0].mxu0
    %707 = vmatprep.mubr.f32.mxu0 0.0
    %708 = vmatmul.mubr.f32.gmra.mrb[0].mxu0 %v186
    %v709 = vpop.f32.mrb[0].mxu0
    %v710 = vadd.f32 0.0, %v709
    %v711 = vpop.f32.mrb[0].mxu0
    %712 = vmatprep.mubr.f32.mxu0 0.0
    %713 = vmatmul.mubr.f32.gmra.mrb[0].mxu0 %v189
    %v714 = vpop.f32.mrb[0].mxu0
    %v715 = vadd.f32 0.0, %v714
    %v716 = vpop.f32.mrb[0].mxu0
    %717 = vmatprep.mubr.f32.mxu0 0.0
    %718 = vmatmul.mubr.f32.gmra.mrb[0].mxu0 %v192
    %v719 = vpop.f32.mrb[0].mxu0
    %v720 = vadd.f32 0.0, %v719
    %v721 = vpop.f32.mrb[0].mxu0
    %722 = vmatprep.mubr.f32.mxu0 0.0
    %723 = vmatmul.mubr.f32.gmra.mrb[0].mxu0 %v195
    %v724 = vpop.f32.mrb[0].mxu0
    %v725 = vadd.f32 0.0, %v724
    %v726 = vpop.f32.mrb[0].mxu0
    %727 = vdwg.mxu0
    %v728 = vadd.f32 %v615, %v690
    %v729 = vadd.f32 %v616, %v695
    %v730 = vadd.f32 %v617, %v700
    %v731 = vadd.f32 %v618, %v705
    %v732 = vadd.f32 %v619, %v710
    %v733 = vadd.f32 %v620, %v715
    %v734 = vadd.f32 %v621, %v720
    %v735 = vadd.f32 %v622, %v725
    %v736 = vtanh.pop %v728
    %v737 = vtanh.pop %v729
    %v738 = vtanh.pop %v730
    %v739 = vtanh.pop %v731
    %v740 = vtanh.pop %v732
    %v741 = vtanh.pop %v733
    %v742 = vtanh.pop %v734
    %v743 = vtanh.pop %v735
    %v744 = vld [vmem:[%s0 + $0x4] sm:$0x1]
    %v745 = vlaneseq
    %v746 = vshrl.u32 %v745, 7
    %v747 = vsub.s32 0, %v746
    %v748 = vrot.slane %v744, %v747
    %v749 = vmul.f32 %v75, %v748
    %v750 = vmul.f32 %v80, %v748
    %v751 = vmul.f32 %v85, %v748
    %v752 = vmul.f32 %v90, %v748
    %v753 = vmul.f32 %v95, %v748
    %v754 = vmul.f32 %v100, %v748
    %v755 = vmul.f32 %v105, %v748
    %v756 = vmul.f32 %v110, %v748
    %v757 = vadd.f32 %v749, %v127
    %v758 = vadd.f32 %v750, %v132
    %v759 = vadd.f32 %v751, %v137
    %v760 = vadd.f32 %v752, %v142
    %v761 = vadd.f32 %v753, %v147
    %v762 = vadd.f32 %v754, %v152
    %v763 = vadd.f32 %v755, %v157
    %v764 = vadd.f32 %v756, %v162
    %765 = vmatprep.subr.mxu0 0.0
    %766 = vmatpush1.msra.mxu0 %v736
    %767 = vmatprep.subr.mxu0 0.0
    %768 = vmatpush1.msra.mxu0 %v737
    %769 = vmatprep.subr.mxu0 0.0
    %770 = vmatpush1.msra.mxu0 %v738
    %771 = vmatprep.subr.mxu0 0.0
    %772 = vmatpush1.msra.mxu0 %v739
    %773 = vmatprep.subr.mxu0 0.0
    %774 = vmatpush1.msra.mxu0 %v740
    %775 = vmatprep.subr.mxu0 0.0
    %776 = vmatpush1.msra.mxu0 %v741
    %777 = vmatprep.subr.mxu0 0.0
    %778 = vmatpush1.msra.mxu0 %v742
    %779 = vmatprep.subr.mxu0 0.0
    %780 = vmatpush1.msra.mxu0 %v743
    %781 = vmatprep.subr.mxu0 0.0
    %782 = vmatpush1.msra.mxu0 0.0
    %783 = vmatprep.subr.mxu0 0.0
    %784 = vmatpush1.msra.mxu0 0.0
    %785 = vmatprep.subr.mxu0 0.0
    %786 = vmatpush1.msra.mxu0 0.0
    %787 = vmatprep.subr.mxu0 0.0
    %788 = vmatpush1.msra.mxu0 0.0
    %789 = vmatprep.subr.mxu0 0.0
    %790 = vmatpush1.msra.mxu0 0.0
    %791 = vmatprep.subr.mxu0 0.0
    %792 = vmatpush1.msra.mxu0 0.0
    %793 = vmatprep.subr.mxu0 0.0
    %794 = vmatpush1.msra.mxu0 0.0
    %795 = vmatprep.subr.mxu0 0.0
    %796 = vmatpush1.msra.mxu0 0.0
    %797 = vmatprep.subr.mxu0 0.0
    %798 = vmatpush1.msra.mxu0 0.0
    %799 = vmatprep.subr.mxu0 0.0
    %800 = vmatpush1.msra.mxu0 0.0
    %801 = vmatprep.subr.mxu0 0.0
    %802 = vmatpush1.msra.mxu0 0.0
    %803 = vmatprep.subr.mxu0 0.0
    %804 = vmatpush1.msra.mxu0 0.0
    %805 = vmatprep.subr.mxu0 0.0
    %806 = vmatpush1.msra.mxu0 0.0
    %807 = vmatprep.subr.mxu0 0.0
    %808 = vmatpush1.msra.mxu0 0.0
    %809 = vmatprep.subr.mxu0 0.0
    %810 = vmatpush1.msra.mxu0 0.0
    %811 = vmatprep.subr.mxu0 0.0
    %812 = vmatpush1.msra.mxu0 0.0
    %813 = vmatprep.subr.mxu0 0.0
    %814 = vmatpush1.msra.mxu0 0.0
    %815 = vmatprep.subr.mxu0 0.0
    %816 = vmatpush1.msra.mxu0 0.0
    %817 = vmatprep.subr.mxu0 0.0
    %818 = vmatpush1.msra.mxu0 0.0
    %819 = vmatprep.subr.mxu0 0.0
    %820 = vmatpush1.msra.mxu0 0.0
    %821 = vmatprep.subr.mxu0 0.0
    %822 = vmatpush1.msra.mxu0 0.0
    %823 = vmatprep.subr.mxu0 0.0
    %824 = vmatpush1.msra.mxu0 0.0
    %825 = vmatprep.subr.mxu0 0.0
    %826 = vmatpush1.msra.mxu0 0.0
    %827 = vmatprep.subr.mxu0 0.0
    %828 = vmatpush1.msra.mxu0 0.0
    %829 = vmatprep.mubr.f32.mxu0 0.0
    %830 = vmatmul.mubr.f32.gmra.mrb[0].mxu0 %v174
    %v831 = vpop.f32.mrb[0].mxu0
    %v832 = vadd.f32 0.0, %v831
    %v833 = vpop.f32.mrb[0].mxu0
    %834 = vmatprep.mubr.f32.mxu0 0.0
    %835 = vmatmul.mubr.f32.gmra.mrb[0].mxu0 %v177
    %v836 = vpop.f32.mrb[0].mxu0
    %v837 = vadd.f32 0.0, %v836
    %v838 = vpop.f32.mrb[0].mxu0
    %839 = vmatprep.mubr.f32.mxu0 0.0
    %840 = vmatmul.mubr.f32.gmra.mrb[0].mxu0 %v180
    %v841 = vpop.f32.mrb[0].mxu0
    %v842 = vadd.f32 0.0, %v841
    %v843 = vpop.f32.mrb[0].mxu0
    %844 = vmatprep.mubr.f32.mxu0 0.0
    %845 = vmatmul.mubr.f32.gmra.mrb[0].mxu0 %v183
    %v846 = vpop.f32.mrb[0].mxu0
    %v847 = vadd.f32 0.0, %v846
    %v848 = vpop.f32.mrb[0].mxu0
    %849 = vmatprep.mubr.f32.mxu0 0.0
    %850 = vmatmul.mubr.f32.gmra.mrb[0].mxu0 %v186
    %v851 = vpop.f32.mrb[0].mxu0
    %v852 = vadd.f32 0.0, %v851
    %v853 = vpop.f32.mrb[0].mxu0
    %854 = vmatprep.mubr.f32.mxu0 0.0
    %855 = vmatmul.mubr.f32.gmra.mrb[0].mxu0 %v189
    %v856 = vpop.f32.mrb[0].mxu0
    %v857 = vadd.f32 0.0, %v856
    %v858 = vpop.f32.mrb[0].mxu0
    %859 = vmatprep.mubr.f32.mxu0 0.0
    %860 = vmatmul.mubr.f32.gmra.mrb[0].mxu0 %v192
    %v861 = vpop.f32.mrb[0].mxu0
    %v862 = vadd.f32 0.0, %v861
    %v863 = vpop.f32.mrb[0].mxu0
    %864 = vmatprep.mubr.f32.mxu0 0.0
    %865 = vmatmul.mubr.f32.gmra.mrb[0].mxu0 %v195
    %v866 = vpop.f32.mrb[0].mxu0
    %v867 = vadd.f32 0.0, %v866
    %v868 = vpop.f32.mrb[0].mxu0
    %869 = vdwg.mxu0
    %v870 = vadd.f32 %v757, %v832
    %v871 = vadd.f32 %v758, %v837
    %v872 = vadd.f32 %v759, %v842
    %v873 = vadd.f32 %v760, %v847
    %v874 = vadd.f32 %v761, %v852
    %v875 = vadd.f32 %v762, %v857
    %v876 = vadd.f32 %v763, %v862
    %v877 = vadd.f32 %v764, %v867
    %v878 = vtanh.pop %v870
    %v879 = vtanh.pop %v871
    %v880 = vtanh.pop %v872
    %v881 = vtanh.pop %v873
    %v882 = vtanh.pop %v874
    %v883 = vtanh.pop %v875
    %v884 = vtanh.pop %v876
    %v885 = vtanh.pop %v877
    %v886 = vld [vmem:[%s0 + $0x5] sm:$0x1]
    %v887 = vlaneseq
    %v888 = vshrl.u32 %v887, 7
    %v889 = vsub.s32 0, %v888
    %v890 = vrot.slane %v886, %v889
    %v891 = vmul.f32 %v75, %v890
    %v892 = vmul.f32 %v80, %v890
    %v893 = vmul.f32 %v85, %v890
    %v894 = vmul.f32 %v90, %v890
    %v895 = vmul.f32 %v95, %v890
    %v896 = vmul.f32 %v100, %v890
    %v897 = vmul.f32 %v105, %v890
    %v898 = vmul.f32 %v110, %v890
    %v899 = vadd.f32 %v891, %v127
    %v900 = vadd.f32 %v892, %v132
    %v901 = vadd.f32 %v893, %v137
    %v902 = vadd.f32 %v894, %v142
    %v903 = vadd.f32 %v895, %v147
    %v904 = vadd.f32 %v896, %v152
    %v905 = vadd.f32 %v897, %v157
    %v906 = vadd.f32 %v898, %v162
    %907 = vmatprep.subr.mxu0 0.0
    %908 = vmatpush1.msra.mxu0 %v878
    %909 = vmatprep.subr.mxu0 0.0
    %910 = vmatpush1.msra.mxu0 %v879
    %911 = vmatprep.subr.mxu0 0.0
    %912 = vmatpush1.msra.mxu0 %v880
    %913 = vmatprep.subr.mxu0 0.0
    %914 = vmatpush1.msra.mxu0 %v881
    %915 = vmatprep.subr.mxu0 0.0
    %916 = vmatpush1.msra.mxu0 %v882
    %917 = vmatprep.subr.mxu0 0.0
    %918 = vmatpush1.msra.mxu0 %v883
    %919 = vmatprep.subr.mxu0 0.0
    %920 = vmatpush1.msra.mxu0 %v884
    %921 = vmatprep.subr.mxu0 0.0
    %922 = vmatpush1.msra.mxu0 %v885
    %923 = vmatprep.subr.mxu0 0.0
    %924 = vmatpush1.msra.mxu0 0.0
    %925 = vmatprep.subr.mxu0 0.0
    %926 = vmatpush1.msra.mxu0 0.0
    %927 = vmatprep.subr.mxu0 0.0
    %928 = vmatpush1.msra.mxu0 0.0
    %929 = vmatprep.subr.mxu0 0.0
    %930 = vmatpush1.msra.mxu0 0.0
    %931 = vmatprep.subr.mxu0 0.0
    %932 = vmatpush1.msra.mxu0 0.0
    %933 = vmatprep.subr.mxu0 0.0
    %934 = vmatpush1.msra.mxu0 0.0
    %935 = vmatprep.subr.mxu0 0.0
    %936 = vmatpush1.msra.mxu0 0.0
    %937 = vmatprep.subr.mxu0 0.0
    %938 = vmatpush1.msra.mxu0 0.0
    %939 = vmatprep.subr.mxu0 0.0
    %940 = vmatpush1.msra.mxu0 0.0
    %941 = vmatprep.subr.mxu0 0.0
    %942 = vmatpush1.msra.mxu0 0.0
    %943 = vmatprep.subr.mxu0 0.0
    %944 = vmatpush1.msra.mxu0 0.0
    %945 = vmatprep.subr.mxu0 0.0
    %946 = vmatpush1.msra.mxu0 0.0
    %947 = vmatprep.subr.mxu0 0.0
    %948 = vmatpush1.msra.mxu0 0.0
    %949 = vmatprep.subr.mxu0 0.0
    %950 = vmatpush1.msra.mxu0 0.0
    %951 = vmatprep.subr.mxu0 0.0
    %952 = vmatpush1.msra.mxu0 0.0
    %953 = vmatprep.subr.mxu0 0.0
    %954 = vmatpush1.msra.mxu0 0.0
    %955 = vmatprep.subr.mxu0 0.0
    %956 = vmatpush1.msra.mxu0 0.0
    %957 = vmatprep.subr.mxu0 0.0
    %958 = vmatpush1.msra.mxu0 0.0
    %959 = vmatprep.subr.mxu0 0.0
    %960 = vmatpush1.msra.mxu0 0.0
    %961 = vmatprep.subr.mxu0 0.0
    %962 = vmatpush1.msra.mxu0 0.0
    %963 = vmatprep.subr.mxu0 0.0
    %964 = vmatpush1.msra.mxu0 0.0
    %965 = vmatprep.subr.mxu0 0.0
    %966 = vmatpush1.msra.mxu0 0.0
    %967 = vmatprep.subr.mxu0 0.0
    %968 = vmatpush1.msra.mxu0 0.0
    %969 = vmatprep.subr.mxu0 0.0
    %970 = vmatpush1.msra.mxu0 0.0
    %971 = vmatprep.mubr.f32.mxu0 0.0
    %972 = vmatmul.mubr.f32.gmra.mrb[0].mxu0 %v174
    %v973 = vpop.f32.mrb[0].mxu0
    %v974 = vadd.f32 0.0, %v973
    %v975 = vpop.f32.mrb[0].mxu0
    %976 = vmatprep.mubr.f32.mxu0 0.0
    %977 = vmatmul.mubr.f32.gmra.mrb[0].mxu0 %v177
    %v978 = vpop.f32.mrb[0].mxu0
    %v979 = vadd.f32 0.0, %v978
    %v980 = vpop.f32.mrb[0].mxu0
    %981 = vmatprep.mubr.f32.mxu0 0.0
    %982 = vmatmul.mubr.f32.gmra.mrb[0].mxu0 %v180
    %v983 = vpop.f32.mrb[0].mxu0
    %v984 = vadd.f32 0.0, %v983
    %v985 = vpop.f32.mrb[0].mxu0
    %986 = vmatprep.mubr.f32.mxu0 0.0
    %987 = vmatmul.mubr.f32.gmra.mrb[0].mxu0 %v183
    %v988 = vpop.f32.mrb[0].mxu0
    %v989 = vadd.f32 0.0, %v988
    %v990 = vpop.f32.mrb[0].mxu0
    %991 = vmatprep.mubr.f32.mxu0 0.0
    %992 = vmatmul.mubr.f32.gmra.mrb[0].mxu0 %v186
    %v993 = vpop.f32.mrb[0].mxu0
    %v994 = vadd.f32 0.0, %v993
    %v995 = vpop.f32.mrb[0].mxu0
    %996 = vmatprep.mubr.f32.mxu0 0.0
    %997 = vmatmul.mubr.f32.gmra.mrb[0].mxu0 %v189
    %v998 = vpop.f32.mrb[0].mxu0
    %v999 = vadd.f32 0.0, %v998
    %v1000 = vpop.f32.mrb[0].mxu0
    %1001 = vmatprep.mubr.f32.mxu0 0.0
    %1002 = vmatmul.mubr.f32.gmra.mrb[0].mxu0 %v192
    %v1003 = vpop.f32.mrb[0].mxu0
    %v1004 = vadd.f32 0.0, %v1003
    %v1005 = vpop.f32.mrb[0].mxu0
    %1006 = vmatprep.mubr.f32.mxu0 0.0
    %1007 = vmatmul.mubr.f32.gmra.mrb[0].mxu0 %v195
    %v1008 = vpop.f32.mrb[0].mxu0
    %v1009 = vadd.f32 0.0, %v1008
    %v1010 = vpop.f32.mrb[0].mxu0
    %1011 = vdwg.mxu0
    %v1012 = vadd.f32 %v899, %v974
    %v1013 = vadd.f32 %v900, %v979
    %v1014 = vadd.f32 %v901, %v984
    %v1015 = vadd.f32 %v902, %v989
    %v1016 = vadd.f32 %v903, %v994
    %v1017 = vadd.f32 %v904, %v999
    %v1018 = vadd.f32 %v905, %v1004
    %v1019 = vadd.f32 %v906, %v1009
    %v1020 = vtanh.pop %v1012
    %v1021 = vtanh.pop %v1013
    %v1022 = vtanh.pop %v1014
    %v1023 = vtanh.pop %v1015
    %v1024 = vtanh.pop %v1016
    %v1025 = vtanh.pop %v1017
    %v1026 = vtanh.pop %v1018
    %v1027 = vtanh.pop %v1019
    %v1028 = vld [vmem:[%s0 + $0x6] sm:$0x1]
    %v1029 = vlaneseq
    %v1030 = vshrl.u32 %v1029, 7
    %v1031 = vsub.s32 0, %v1030
    %v1032 = vrot.slane %v1028, %v1031
    %v1033 = vmul.f32 %v75, %v1032
    %v1034 = vmul.f32 %v80, %v1032
    %v1035 = vmul.f32 %v85, %v1032
    %v1036 = vmul.f32 %v90, %v1032
    %v1037 = vmul.f32 %v95, %v1032
    %v1038 = vmul.f32 %v100, %v1032
    %v1039 = vmul.f32 %v105, %v1032
    %v1040 = vmul.f32 %v110, %v1032
    %v1041 = vadd.f32 %v1033, %v127
    %v1042 = vadd.f32 %v1034, %v132
    %v1043 = vadd.f32 %v1035, %v137
    %v1044 = vadd.f32 %v1036, %v142
    %v1045 = vadd.f32 %v1037, %v147
    %v1046 = vadd.f32 %v1038, %v152
    %v1047 = vadd.f32 %v1039, %v157
    %v1048 = vadd.f32 %v1040, %v162
    %1049 = vmatprep.subr.mxu0 0.0
    %1050 = vmatpush1.msra.mxu0 %v1020
    %1051 = vmatprep.subr.mxu0 0.0
    %1052 = vmatpush1.msra.mxu0 %v1021
    %1053 = vmatprep.subr.mxu0 0.0
    %1054 = vmatpush1.msra.mxu0 %v1022
    %1055 = vmatprep.subr.mxu0 0.0
    %1056 = vmatpush1.msra.mxu0 %v1023
    %1057 = vmatprep.subr.mxu0 0.0
    %1058 = vmatpush1.msra.mxu0 %v1024
    %1059 = vmatprep.subr.mxu0 0.0
    %1060 = vmatpush1.msra.mxu0 %v1025
    %1061 = vmatprep.subr.mxu0 0.0
    %1062 = vmatpush1.msra.mxu0 %v1026
    %1063 = vmatprep.subr.mxu0 0.0
    %1064 = vmatpush1.msra.mxu0 %v1027
    %1065 = vmatprep.subr.mxu0 0.0
    %1066 = vmatpush1.msra.mxu0 0.0
    %1067 = vmatprep.subr.mxu0 0.0
    %1068 = vmatpush1.msra.mxu0 0.0
    %1069 = vmatprep.subr.mxu0 0.0
    %1070 = vmatpush1.msra.mxu0 0.0
    %1071 = vmatprep.subr.mxu0 0.0
    %1072 = vmatpush1.msra.mxu0 0.0
    %1073 = vmatprep.subr.mxu0 0.0
    %1074 = vmatpush1.msra.mxu0 0.0
    %1075 = vmatprep.subr.mxu0 0.0
    %1076 = vmatpush1.msra.mxu0 0.0
    %1077 = vmatprep.subr.mxu0 0.0
    %1078 = vmatpush1.msra.mxu0 0.0
    %1079 = vmatprep.subr.mxu0 0.0
    %1080 = vmatpush1.msra.mxu0 0.0
    %1081 = vmatprep.subr.mxu0 0.0
    %1082 = vmatpush1.msra.mxu0 0.0
    %1083 = vmatprep.subr.mxu0 0.0
    %1084 = vmatpush1.msra.mxu0 0.0
    %1085 = vmatprep.subr.mxu0 0.0
    %1086 = vmatpush1.msra.mxu0 0.0
    %1087 = vmatprep.subr.mxu0 0.0
    %1088 = vmatpush1.msra.mxu0 0.0
    %1089 = vmatprep.subr.mxu0 0.0
    %1090 = vmatpush1.msra.mxu0 0.0
    %1091 = vmatprep.subr.mxu0 0.0
    %1092 = vmatpush1.msra.mxu0 0.0
    %1093 = vmatprep.subr.mxu0 0.0
    %1094 = vmatpush1.msra.mxu0 0.0
    %1095 = vmatprep.subr.mxu0 0.0
    %1096 = vmatpush1.msra.mxu0 0.0
    %1097 = vmatprep.subr.mxu0 0.0
    %1098 = vmatpush1.msra.mxu0 0.0
    %1099 = vmatprep.subr.mxu0 0.0
    %1100 = vmatpush1.msra.mxu0 0.0
    %1101 = vmatprep.subr.mxu0 0.0
    %1102 = vmatpush1.msra.mxu0 0.0
    %1103 = vmatprep.subr.mxu0 0.0
    %1104 = vmatpush1.msra.mxu0 0.0
    %1105 = vmatprep.subr.mxu0 0.0
    %1106 = vmatpush1.msra.mxu0 0.0
    %1107 = vmatprep.subr.mxu0 0.0
    %1108 = vmatpush1.msra.mxu0 0.0
    %1109 = vmatprep.subr.mxu0 0.0
    %1110 = vmatpush1.msra.mxu0 0.0
    %1111 = vmatprep.subr.mxu0 0.0
    %1112 = vmatpush1.msra.mxu0 0.0
    %1113 = vmatprep.mubr.f32.mxu0 0.0
    %1114 = vmatmul.mubr.f32.gmra.mrb[0].mxu0 %v174
    %v1115 = vpop.f32.mrb[0].mxu0
    %v1116 = vadd.f32 0.0, %v1115
    %v1117 = vpop.f32.mrb[0].mxu0
    %1118 = vmatprep.mubr.f32.mxu0 0.0
    %1119 = vmatmul.mubr.f32.gmra.mrb[0].mxu0 %v177
    %v1120 = vpop.f32.mrb[0].mxu0
    %v1121 = vadd.f32 0.0, %v1120
    %v1122 = vpop.f32.mrb[0].mxu0
    %1123 = vmatprep.mubr.f32.mxu0 0.0
    %1124 = vmatmul.mubr.f32.gmra.mrb[0].mxu0 %v180
    %v1125 = vpop.f32.mrb[0].mxu0
    %v1126 = vadd.f32 0.0, %v1125
    %v1127 = vpop.f32.mrb[0].mxu0
    %1128 = vmatprep.mubr.f32.mxu0 0.0
    %1129 = vmatmul.mubr.f32.gmra.mrb[0].mxu0 %v183
    %v1130 = vpop.f32.mrb[0].mxu0
    %v1131 = vadd.f32 0.0, %v1130
    %v1132 = vpop.f32.mrb[0].mxu0
    %1133 = vmatprep.mubr.f32.mxu0 0.0
    %1134 = vmatmul.mubr.f32.gmra.mrb[0].mxu0 %v186
    %v1135 = vpop.f32.mrb[0].mxu0
    %v1136 = vadd.f32 0.0, %v1135
    %v1137 = vpop.f32.mrb[0].mxu0
    %1138 = vmatprep.mubr.f32.mxu0 0.0
    %1139 = vmatmul.mubr.f32.gmra.mrb[0].mxu0 %v189
    %v1140 = vpop.f32.mrb[0].mxu0
    %v1141 = vadd.f32 0.0, %v1140
    %v1142 = vpop.f32.mrb[0].mxu0
    %1143 = vmatprep.mubr.f32.mxu0 0.0
    %1144 = vmatmul.mubr.f32.gmra.mrb[0].mxu0 %v192
    %v1145 = vpop.f32.mrb[0].mxu0
    %v1146 = vadd.f32 0.0, %v1145
    %v1147 = vpop.f32.mrb[0].mxu0
    %1148 = vmatprep.mubr.f32.mxu0 0.0
    %1149 = vmatmul.mubr.f32.gmra.mrb[0].mxu0 %v195
    %v1150 = vpop.f32.mrb[0].mxu0
    %v1151 = vadd.f32 0.0, %v1150
    %v1152 = vpop.f32.mrb[0].mxu0
    %1153 = vdwg.mxu0
    %v1154 = vadd.f32 %v1041, %v1116
    %v1155 = vadd.f32 %v1042, %v1121
    %v1156 = vadd.f32 %v1043, %v1126
    %v1157 = vadd.f32 %v1044, %v1131
    %v1158 = vadd.f32 %v1045, %v1136
    %v1159 = vadd.f32 %v1046, %v1141
    %v1160 = vadd.f32 %v1047, %v1146
    %v1161 = vadd.f32 %v1048, %v1151
    %v1162 = vtanh.pop %v1154
    %v1163 = vtanh.pop %v1155
    %v1164 = vtanh.pop %v1156
    %v1165 = vtanh.pop %v1157
    %v1166 = vtanh.pop %v1158
    %v1167 = vtanh.pop %v1159
    %v1168 = vtanh.pop %v1160
    %v1169 = vtanh.pop %v1161
    %v1170 = vld [vmem:[%s0 + $0x7] sm:$0x1]
    %v1171 = vlaneseq
    %v1172 = vshrl.u32 %v1171, 7
    %v1173 = vsub.s32 0, %v1172
    %v1174 = vrot.slane %v1170, %v1173
    %v1175 = vmul.f32 %v75, %v1174
    %v1176 = vmul.f32 %v80, %v1174
    %v1177 = vmul.f32 %v85, %v1174
    %v1178 = vmul.f32 %v90, %v1174
    %v1179 = vmul.f32 %v95, %v1174
    %v1180 = vmul.f32 %v100, %v1174
    %v1181 = vmul.f32 %v105, %v1174
    %v1182 = vmul.f32 %v110, %v1174
    %v1183 = vadd.f32 %v1175, %v127
    %v1184 = vadd.f32 %v1176, %v132
    %v1185 = vadd.f32 %v1177, %v137
    %v1186 = vadd.f32 %v1178, %v142
    %v1187 = vadd.f32 %v1179, %v147
    %v1188 = vadd.f32 %v1180, %v152
    %v1189 = vadd.f32 %v1181, %v157
    %v1190 = vadd.f32 %v1182, %v162
    %1191 = vmatprep.subr.mxu0 0.0
    %1192 = vmatpush1.msra.mxu0 %v1162
    %1193 = vmatprep.subr.mxu0 0.0
    %1194 = vmatpush1.msra.mxu0 %v1163
    %1195 = vmatprep.subr.mxu0 0.0
    %1196 = vmatpush1.msra.mxu0 %v1164
    %1197 = vmatprep.subr.mxu0 0.0
    %1198 = vmatpush1.msra.mxu0 %v1165
    %1199 = vmatprep.subr.mxu0 0.0
    %1200 = vmatpush1.msra.mxu0 %v1166
    %1201 = vmatprep.subr.mxu0 0.0
    %1202 = vmatpush1.msra.mxu0 %v1167
    %1203 = vmatprep.subr.mxu0 0.0
    %1204 = vmatpush1.msra.mxu0 %v1168
    %1205 = vmatprep.subr.mxu0 0.0
    %1206 = vmatpush1.msra.mxu0 %v1169
    %1207 = vmatprep.subr.mxu0 0.0
    %1208 = vmatpush1.msra.mxu0 0.0
    %1209 = vmatprep.subr.mxu0 0.0
    %1210 = vmatpush1.msra.mxu0 0.0
    %1211 = vmatprep.subr.mxu0 0.0
    %1212 = vmatpush1.msra.mxu0 0.0
    %1213 = vmatprep.subr.mxu0 0.0
    %1214 = vmatpush1.msra.mxu0 0.0
    %1215 = vmatprep.subr.mxu0 0.0
    %1216 = vmatpush1.msra.mxu0 0.0
    %1217 = vmatprep.subr.mxu0 0.0
    %1218 = vmatpush1.msra.mxu0 0.0
    %1219 = vmatprep.subr.mxu0 0.0
    %1220 = vmatpush1.msra.mxu0 0.0
    %1221 = vmatprep.subr.mxu0 0.0
    %1222 = vmatpush1.msra.mxu0 0.0
    %1223 = vmatprep.subr.mxu0 0.0
    %1224 = vmatpush1.msra.mxu0 0.0
    %1225 = vmatprep.subr.mxu0 0.0
    %1226 = vmatpush1.msra.mxu0 0.0
    %1227 = vmatprep.subr.mxu0 0.0
    %1228 = vmatpush1.msra.mxu0 0.0
    %1229 = vmatprep.subr.mxu0 0.0
    %1230 = vmatpush1.msra.mxu0 0.0
    %1231 = vmatprep.subr.mxu0 0.0
    %1232 = vmatpush1.msra.mxu0 0.0
    %1233 = vmatprep.subr.mxu0 0.0
    %1234 = vmatpush1.msra.mxu0 0.0
    %1235 = vmatprep.subr.mxu0 0.0
    %1236 = vmatpush1.msra.mxu0 0.0
    %1237 = vmatprep.subr.mxu0 0.0
    %1238 = vmatpush1.msra.mxu0 0.0
    %1239 = vmatprep.subr.mxu0 0.0
    %1240 = vmatpush1.msra.mxu0 0.0
    %1241 = vmatprep.subr.mxu0 0.0
    %1242 = vmatpush1.msra.mxu0 0.0
    %1243 = vmatprep.subr.mxu0 0.0
    %1244 = vmatpush1.msra.mxu0 0.0
    %1245 = vmatprep.subr.mxu0 0.0
    %1246 = vmatpush1.msra.mxu0 0.0
    %1247 = vmatprep.subr.mxu0 0.0
    %1248 = vmatpush1.msra.mxu0 0.0
    %1249 = vmatprep.subr.mxu0 0.0
    %1250 = vmatpush1.msra.mxu0 0.0
    %1251 = vmatprep.subr.mxu0 0.0
    %1252 = vmatpush1.msra.mxu0 0.0
    %1253 = vmatprep.subr.mxu0 0.0
    %1254 = vmatpush1.msra.mxu0 0.0
    %1255 = vmatprep.mubr.f32.mxu0 0.0
    %1256 = vmatmul.mubr.f32.gmra.mrb[0].mxu0 %v174
    %v1257 = vpop.f32.mrb[0].mxu0
    %v1258 = vadd.f32 0.0, %v1257
    %v1259 = vpop.f32.mrb[0].mxu0
    %1260 = vmatprep.mubr.f32.mxu0 0.0
    %1261 = vmatmul.mubr.f32.gmra.mrb[0].mxu0 %v177
    %v1262 = vpop.f32.mrb[0].mxu0
    %v1263 = vadd.f32 0.0, %v1262
    %v1264 = vpop.f32.mrb[0].mxu0
    %1265 = vmatprep.mubr.f32.mxu0 0.0
    %1266 = vmatmul.mubr.f32.gmra.mrb[0].mxu0 %v180
    %v1267 = vpop.f32.mrb[0].mxu0
    %v1268 = vadd.f32 0.0, %v1267
    %v1269 = vpop.f32.mrb[0].mxu0
    %1270 = vmatprep.mubr.f32.mxu0 0.0
    %1271 = vmatmul.mubr.f32.gmra.mrb[0].mxu0 %v183
    %v1272 = vpop.f32.mrb[0].mxu0
    %v1273 = vadd.f32 0.0, %v1272
    %v1274 = vpop.f32.mrb[0].mxu0
    %1275 = vmatprep.mubr.f32.mxu0 0.0
    %1276 = vmatmul.mubr.f32.gmra.mrb[0].mxu0 %v186
    %v1277 = vpop.f32.mrb[0].mxu0
    %v1278 = vadd.f32 0.0, %v1277
    %v1279 = vpop.f32.mrb[0].mxu0
    %1280 = vmatprep.mubr.f32.mxu0 0.0
    %1281 = vmatmul.mubr.f32.gmra.mrb[0].mxu0 %v189
    %v1282 = vpop.f32.mrb[0].mxu0
    %v1283 = vadd.f32 0.0, %v1282
    %v1284 = vpop.f32.mrb[0].mxu0
    %1285 = vmatprep.mubr.f32.mxu0 0.0
    %1286 = vmatmul.mubr.f32.gmra.mrb[0].mxu0 %v192
    %v1287 = vpop.f32.mrb[0].mxu0
    %v1288 = vadd.f32 0.0, %v1287
    %v1289 = vpop.f32.mrb[0].mxu0
    %1290 = vmatprep.mubr.f32.mxu0 0.0
    %1291 = vmatmul.mubr.f32.gmra.mrb[0].mxu0 %v195
    %v1292 = vpop.f32.mrb[0].mxu0
    %v1293 = vadd.f32 0.0, %v1292
    %v1294 = vpop.f32.mrb[0].mxu0
    %1295 = vdwg.mxu0
    %v1296 = vadd.f32 %v1183, %v1258
    %v1297 = vadd.f32 %v1184, %v1263
    %v1298 = vadd.f32 %v1185, %v1268
    %v1299 = vadd.f32 %v1186, %v1273
    %v1300 = vadd.f32 %v1187, %v1278
    %v1301 = vadd.f32 %v1188, %v1283
    %v1302 = vadd.f32 %v1189, %v1288
    %v1303 = vadd.f32 %v1190, %v1293
    %v1304 = vtanh.pop %v1296
    %v1305 = vtanh.pop %v1297
    %v1306 = vtanh.pop %v1298
    %v1307 = vtanh.pop %v1299
    %v1308 = vtanh.pop %v1300
    %v1309 = vtanh.pop %v1301
    %v1310 = vtanh.pop %v1302
    %v1311 = vtanh.pop %v1303
    %vm1312 = vcmask 15360
    %1313 = vst.msk [vmem:[#allocation2] sm:$0xff] %vm1312, %v1304
    %1314 = vst.msk [vmem:[#allocation2 + $0x8] sm:$0xff] %vm1312, %v1305
    %1315 = vst.msk [vmem:[#allocation2 + $0x10] sm:$0xff] %vm1312, %v1306
    %1316 = vst.msk [vmem:[#allocation2 + $0x18] sm:$0xff] %vm1312, %v1307
    %1317 = vst.msk [vmem:[#allocation2 + $0x20] sm:$0xff] %vm1312, %v1308
    %1318 = vst.msk [vmem:[#allocation2 + $0x28] sm:$0xff] %vm1312, %v1309
    %1319 = vst.msk [vmem:[#allocation2 + $0x30] sm:$0xff] %vm1312, %v1310
    %1320 = vst.msk [vmem:[#allocation2 + $0x38] sm:$0xff] %vm1312, %v1311
    // Predicated region
    $region30: #{tpu_custom_call.1} parent=1 // pred_check
      %p1321 = pneg %p26
    $region31: #{tpu_custom_call.1} parent=1 // pred_check_branch
      %1323 = sbr.rel (%p1321) target = $region33
    $region32: #{tpu_custom_call.1} parent=1 // pred_region
      %v1324 = vld [vmem:[%s4] sm:$0x1]
      %v1325 = vld [vmem:[#allocation2] sm:$0xff]
      %v1326 = vld [vmem:[#allocation2 + $0x8] sm:$0xff]
      %v1327 = vld [vmem:[#allocation2 + $0x10] sm:$0xff]
      %v1328 = vld [vmem:[#allocation2 + $0x18] sm:$0xff]
      %v1329 = vld [vmem:[#allocation2 + $0x20] sm:$0xff]
      %v1330 = vld [vmem:[#allocation2 + $0x28] sm:$0xff]
      %v1331 = vld [vmem:[#allocation2 + $0x30] sm:$0xff]
      %v1332 = vld [vmem:[#allocation2 + $0x38] sm:$0xff]
      %v1333 = vld [vmem:[#allocation3] sm:$0x1]
      %1335 = vset.pattern.permute.xlu0 0
      %1336 = vperm.xlu0 %1335, %v1333
      %v1337 = vpop.permute.xlu0 %1336
      %v1339 = vlaneseq
      %v1340 = vshrl.u32 %v1339, 7
      %v1341 = vsub.s32 0, %v1340
      %v1342 = vrot.slane %v1337, %v1341
      %v1344 = vsel %vm172, %v1324, 0
      %1346 = vmatprep.subr.mxu0 0.0
      %1347 = vmatpush1.msra.mxu0 %v1325
      %1348 = vmatprep.subr.mxu0 0.0
      %1349 = vmatpush1.msra.mxu0 %v1326
      %1350 = vmatprep.subr.mxu0 0.0
      %1351 = vmatpush1.msra.mxu0 %v1327
      %1352 = vmatprep.subr.mxu0 0.0
      %1353 = vmatpush1.msra.mxu0 %v1328
      %1354 = vmatprep.subr.mxu0 0.0
      %1355 = vmatpush1.msra.mxu0 %v1329
      %1356 = vmatprep.subr.mxu0 0.0
      %1357 = vmatpush1.msra.mxu0 %v1330
      %1358 = vmatprep.subr.mxu0 0.0
      %1359 = vmatpush1.msra.mxu0 %v1331
      %1360 = vmatprep.subr.mxu0 0.0
      %1361 = vmatpush1.msra.mxu0 %v1332
      %1362 = vmatprep.subr.mxu0 0.0
      %1363 = vmatpush1.msra.mxu0 0.0
      %1364 = vmatprep.subr.mxu0 0.0
      %1365 = vmatpush1.msra.mxu0 0.0
      %1366 = vmatprep.subr.mxu0 0.0
      %1367 = vmatpush1.msra.mxu0 0.0
      %1368 = vmatprep.subr.mxu0 0.0
      %1369 = vmatpush1.msra.mxu0 0.0
      %1370 = vmatprep.subr.mxu0 0.0
      %1371 = vmatpush1.msra.mxu0 0.0
      %1372 = vmatprep.subr.mxu0 0.0
      %1373 = vmatpush1.msra.mxu0 0.0
      %1374 = vmatprep.subr.mxu0 0.0
      %1375 = vmatpush1.msra.mxu0 0.0
      %1376 = vmatprep.subr.mxu0 0.0
      %1377 = vmatpush1.msra.mxu0 0.0
      %1378 = vmatprep.subr.mxu0 0.0
      %1379 = vmatpush1.msra.mxu0 0.0
      %1380 = vmatprep.subr.mxu0 0.0
      %1381 = vmatpush1.msra.mxu0 0.0
      %1382 = vmatprep.subr.mxu0 0.0
      %1383 = vmatpush1.msra.mxu0 0.0
      %1384 = vmatprep.subr.mxu0 0.0
      %1385 = vmatpush1.msra.mxu0 0.0
      %1386 = vmatprep.subr.mxu0 0.0
      %1387 = vmatpush1.msra.mxu0 0.0
      %1388 = vmatprep.subr.mxu0 0.0
      %1389 = vmatpush1.msra.mxu0 0.0
      %1390 = vmatprep.subr.mxu0 0.0
      %1391 = vmatpush1.msra.mxu0 0.0
      %1392 = vmatprep.subr.mxu0 0.0
      %1393 = vmatpush1.msra.mxu0 0.0
      %1394 = vmatprep.subr.mxu0 0.0
      %1395 = vmatpush1.msra.mxu0 0.0
      %1396 = vmatprep.subr.mxu0 0.0
      %1397 = vmatpush1.msra.mxu0 0.0
      %1398 = vmatprep.subr.mxu0 0.0
      %1399 = vmatpush1.msra.mxu0 0.0
      %1400 = vmatprep.subr.mxu0 0.0
      %1401 = vmatpush1.msra.mxu0 0.0
      %1402 = vmatprep.subr.mxu0 0.0
      %1403 = vmatpush1.msra.mxu0 0.0
      %1404 = vmatprep.subr.mxu0 0.0
      %1405 = vmatpush1.msra.mxu0 0.0
      %1406 = vmatprep.subr.mxu0 0.0
      %1407 = vmatpush1.msra.mxu0 0.0
      %1408 = vmatprep.subr.mxu0 0.0
      %1409 = vmatpush1.msra.mxu0 0.0
      %1410 = vmatprep.mubr.f32.mxu0 0.0
      %1411 = vmatmul.mubr.f32.gmra.mrb[0].mxu0 %v1344
      %v1412 = vpop.f32.mrb[0].mxu0
      %v1413 = vadd.f32 %v1342, %v1412
      %v1414 = vpop.f32.mrb[0].mxu0
      %1415 = vdwg.mxu0
      %vm1416 = vcmask 8192
      %1417 = vst.msk [vmem:[#allocation4] sm:$0x1] %vm1416, %v1413
    $region33: #{tpu_custom_call.1} parent=1 // pred_fallthru
      _
    // Predicated region
    $region34: #{tpu_custom_call.1} parent=1 // pred_check
      _
    $region35: #{tpu_custom_call.1} parent=1 // pred_check_branch
      %1419 = sbr.rel (0) target = $region37
    $region36: #{tpu_custom_call.1} parent=1 // pred_region
      %s1421 = ssub.s32 16, 16
      %1422 = vsyncadd [#allocation5], %s1421
      %s1424 = sshll.u32 [#allocation4], 4
      %s1425 = int_to_ptr.vmem [resolvable:$true] %s1424
      %1427 = dma.vmem_to_hbm [thread:$0]  %s1425, 16, %s6, [#allocation5]
    $region37: #{tpu_custom_call.1} parent=1 // pred_fallthru
      _
    // Predicated region
    $region38: #{tpu_custom_call.1} parent=1 // pred_check
      _
    $region39: #{tpu_custom_call.1} parent=1 // pred_check_branch
      %1429 = sbr.rel (0) target = $region41
    $region40: #{tpu_custom_call.1} parent=1 // pred_region
      %1430 = dma.done [#allocation5], 16
    $region41: #{tpu_custom_call.1} parent=1 // pred_fallthru
      _
    %1431 = vsyncpa [#allocation5], 1

</llo_original>
